<compile_context>
chip_gen: v7x
topology: tpu7x:2x2x1
jax: 0.10.0
libtpu: 0.0.40
codegen_flags: <defaults>
</compile_context>

<pallas_src>
import functools

import jax
import jax.numpy as jnp
from jax.experimental import pallas as pl
from jax.experimental.pallas import tpu as pltpu


_NEG_PAD = -1e30   # stands in for the implicit -inf padding of F.max_pool2d
_POS_PAD = 1e30    # +inf padding for the (negated) min-pool


# ----------------------------------------------------------------------------------
# In-kernel soft morphology (2D planes, values in [0, 1])
# ----------------------------------------------------------------------------------
def _shift(x, offset, axis, fill):
    """s[i] = x[i + offset] along `axis`; out-of-range positions get `fill` (offset=+-1)."""
    h, w = x.shape
    if axis == 0:
        pad = jnp.full((1, w), fill, x.dtype)
        if offset > 0:
            return jnp.concatenate([x[1:, :], pad], axis=0)
        return jnp.concatenate([pad, x[:-1, :]], axis=0)
    else:
        pad = jnp.full((h, 1), fill, x.dtype)
        if offset > 0:
            return jnp.concatenate([x[:, 1:], pad], axis=1)
        return jnp.concatenate([pad, x[:, :-1]], axis=1)


def _pool3_max(x, axis):
    return jnp.maximum(jnp.maximum(_shift(x, 1, axis, _NEG_PAD), x),
                       _shift(x, -1, axis, _NEG_PAD))


def _pool3_min(x, axis):
    return jnp.minimum(jnp.minimum(_shift(x, 1, axis, _POS_PAD), x),
                       _shift(x, -1, axis, _POS_PAD))


def _soft_erode(x):
    # torch: min(-maxpool(-x, (3,1), pad (1,0)), -maxpool(-x, (1,3), pad (0,1)))
    return jnp.minimum(_pool3_min(x, 0), _pool3_min(x, 1))


def _soft_dilate(x):
    # torch: maxpool(x, (3,3), pad (1,1))  (separable)
    return _pool3_max(_pool3_max(x, 0), 1)


def _soft_open(x):
    return _soft_dilate(_soft_erode(x))


def _soft_skel(x, num_iter):
    img = x
    skel = jnp.maximum(img - _soft_open(img), 0.0)
    for _ in range(num_iter):
        img = _soft_erode(img)
        delta = jnp.maximum(img - _soft_open(img), 0.0)
        skel = skel + jnp.maximum(delta - skel * delta, 0.0)
    return skel


# ----------------------------------------------------------------------------------
# Fused statistics kernel: one (batch, channel) plane per grid step
# ----------------------------------------------------------------------------------
def _stats_kernel(logits_ref, target_ref, out_ref, *, num_iter):
    """Blocks:
       logits_ref : (1, 1, H, W) raw logits
       target_ref : (1, 1, H, W) one-hot target
       out_ref    : (1, C, 8)    per-(b, c) stats, resident across the channel axis
         cols: [sum(p*y), sum(p), sum(y), sum(bce),
                sum(skel_p*y), sum(skel_p), sum(skel_y*p), sum(skel_y)]
    """
    x = logits_ref[0, 0].astype(jnp.float32)   # (H, W)
    y = target_ref[0, 0].astype(jnp.float32)   # (H, W)

    # sigmoid + stable BCE-with-logits sharing one exp / one log / one approx reciprocal
    e = jnp.exp(-jnp.abs(x))                        # EUP
    inv = pl.reciprocal(1.0 + e, approx=True)       # EUP (approx) instead of a divide
    p = jnp.where(x >= 0.0, inv, e * inv)           # sigmoid(x)
    bce = jnp.maximum(x, 0.0) - x * y + jnp.log(1.0 + e)   # softplus(x) - x*y

    skel_p = _soft_skel(p, num_iter)
    skel_y = _soft_skel(y, num_iter)

    def _s(v):  # full-plane sum -> (1, 1)
        return jnp.sum(jnp.sum(v, axis=1, keepdims=True), axis=0, keepdims=True)

    row = jnp.concatenate(
        [_s(p * y), _s(p), _s(y), _s(bce),
         _s(skel_p * y), _s(skel_p), _s(skel_y * p), _s(skel_y)], axis=1)   # (1, 8)

    c = pl.program_id(1)
    out_ref[0, pl.ds(c, 1), :] = row


def _compute_stats(net_output, target, num_iter):
    B, C, H, W = net_output.shape
    kernel = functools.partial(_stats_kernel, num_iter=num_iter)
    return pl.pallas_call(
        kernel,
        out_shape=jax.ShapeDtypeStruct((B, C, 8), jnp.float32),
        grid_spec=pltpu.PrefetchScalarGridSpec(
            num_scalar_prefetch=0,
            grid=(B, C),
            in_specs=[
                pl.BlockSpec((1, 1, H, W), lambda b, c: (b, c, 0, 0)),
                pl.BlockSpec((1, 1, H, W), lambda b, c: (b, c, 0, 0)),
            ],
            out_specs=pl.BlockSpec((1, C, 8), lambda b, c: (b, 0, 0)),
        ),
        compiler_params=pltpu.CompilerParams(
            dimension_semantics=("parallel", "arbitrary")),
    )(net_output, target)


# ----------------------------------------------------------------------------------
# Cheap scalar combination (plain JAX on the tiny stats tensor)
# ----------------------------------------------------------------------------------
def _combine_stats(stats, total_elems, *, weight_ce, weight_dice, weight_cl,
                   batch_dice, do_bg, smooth, cl_smooth, cl_exclude_first_channel):
    intersect, sum_pred, sum_gt, bce_sum = (stats[..., 0], stats[..., 1],
                                            stats[..., 2], stats[..., 3])
    sp_y, sp_sum, sy_p, sy_sum = (stats[..., 4], stats[..., 5],
                                  stats[..., 6], stats[..., 7])

    # --- MemoryEfficientSoftDiceLoss (apply_nonlin=sigmoid) ---
    if not do_bg:
        intersect, sum_pred, sum_gt = intersect[:, 1:], sum_pred[:, 1:], sum_gt[:, 1:]
    if batch_dice:
        intersect, sum_pred, sum_gt = intersect.sum(0), sum_pred.sum(0), sum_gt.sum(0)
    dc = (2.0 * intersect + smooth) / jnp.maximum(sum_gt + sum_pred + smooth, 1e-8)
    dc_loss = -jnp.mean(dc)

    # --- nn.BCEWithLogitsLoss(reduction='mean') ---
    ce_loss = jnp.sum(bce_sum) / total_elems

    # --- soft clDice ---
    if cl_exclude_first_channel:
        sp_y, sp_sum, sy_p, sy_sum = sp_y[:, 1:], sp_sum[:, 1:], sy_p[:, 1:], sy_sum[:, 1:]
    tprec = (jnp.sum(sp_y) + cl_smooth) / (jnp.sum(sp_sum) + cl_smooth)
    tsens = (jnp.sum(sy_p) + cl_smooth) / (jnp.sum(sy_sum) + cl_smooth)
    cl_loss = 1.0 - 2.0 * (tprec * tsens) / (tprec + tsens)

    return weight_ce * ce_loss + weight_dice * dc_loss + weight_cl * cl_loss


@functools.partial(jax.jit, static_argnames=("weight_ce", "weight_dice", "weight_cl",
                                             "batch_dice", "do_bg", "smooth",
                                             "cl_iters", "cl_smooth",
                                             "cl_exclude_first_channel"))
def cl_and_dc_and_bce_loss(net_output, target, *,
                           weight_ce=1.0, weight_dice=1.0, weight_cl=0.002,
                           batch_dice=True, do_bg=True, smooth=1e-5,
                           cl_iters=3, cl_smooth=1.0, cl_exclude_first_channel=True):
    """JAX/Pallas equivalent of CL_and_DC_and_BCE_loss.forward (use_ignore_label=False)."""
    B, C, H, W = net_output.shape
    stats = _compute_stats(net_output, target, cl_iters)
    return _combine_stats(stats, B * C * H * W,
                          weight_ce=weight_ce, weight_dice=weight_dice,
                          weight_cl=weight_cl, batch_dice=batch_dice, do_bg=do_bg,
                          smooth=smooth, cl_smooth=cl_smooth,
                          cl_exclude_first_channel=cl_exclude_first_channel)


# ----------------------------------------------------------------------------------
# Pure-JAX reference (for correctness checking; independent pad/slice formulation)
# ----------------------------------------------------------------------------------
def _ref_pool3(x, axis, op, fill):
    pad_width = [(0, 0)] * x.ndim
    pad_width[axis] = (1, 1)
    xp = jnp.pad(x, pad_width, constant_values=fill)
    n = x.shape[axis]
    a = jax.lax.slice_in_dim(xp, 0, n, axis=axis)
    b = jax.lax.slice_in_dim(xp, 1, n + 1, axis=axis)
    c = jax.lax.slice_in_dim(xp, 2, n + 2, axis=axis)
    return op(op(a, b), c)


def _ref_erode(x):
    return jnp.minimum(_ref_pool3(x, 2, jnp.minimum, _POS_PAD),
                       _ref_pool3(x, 3, jnp.minimum, _POS_PAD))


def _ref_dilate(x):
    return _ref_pool3(_ref_pool3(x, 2, jnp.maximum, _NEG_PAD), 3, jnp.maximum, _NEG_PAD)


def _ref_soft_skel(x, num_iter):
    img = x
    skel = jax.nn.relu(img - _ref_dilate(_ref_erode(img)))
    for _ in range(num_iter):
        img = _ref_erode(img)
        delta = jax.nn.relu(img - _ref_dilate(_ref_erode(img)))
        skel = skel + jax.nn.relu(delta - skel * delta)
    return skel


def _reference_stats(net_output, target, num_iter):
    x = net_output.astype(jnp.float32)
    y = target.astype(jnp.float32)
    p = jax.nn.sigmoid(x)
    bce = jnp.maximum(x, 0.0) - x * y + jnp.log1p(jnp.exp(-jnp.abs(x)))
    skel_p = _ref_soft_skel(p, num_iter)
    skel_y = _ref_soft_skel(y, num_iter)
    ax = (2, 3)
    return jnp.stack([jnp.sum(p * y, ax), jnp.sum(p, ax), jnp.sum(y, ax),
                      jnp.sum(bce, ax), jnp.sum(skel_p * y, ax), jnp.sum(skel_p, ax),
                      jnp.sum(skel_y * p, ax), jnp.sum(skel_y, ax)], axis=-1)


if __name__ == "__main__":
    key = jax.random.PRNGKey(0)
    k1, k2 = jax.random.split(key)

    B, C, H, W = 2, 4, 16, 16
    net_output = jax.random.normal(k1, (B, C, H, W), dtype=jnp.float32)
    labels = jax.random.randint(k2, (B, H, W), 0, C, dtype=jnp.int32)
    target = jax.nn.one_hot(labels, C, axis=1, dtype=jnp.float32)   # one-hot, as required

    loss = jax.block_until_ready(cl_and_dc_and_bce_loss(net_output, target))

    # check the per-(b, c) sufficient statistics against an independent JAX reference
    kern_stats = jax.block_until_ready(_compute_stats(net_output, target, 3))
    ref_stats = _reference_stats(net_output, target, 3)
    assert jnp.allclose(kern_stats, ref_stats, rtol=5e-3, atol=5e-3), (kern_stats, ref_stats)

    # check the final scalar
    ref_loss = _combine_stats(ref_stats, B * C * H * W,
                              weight_ce=1.0, weight_dice=1.0, weight_cl=0.002,
                              batch_dice=True, do_bg=True, smooth=1e-5,
                              cl_smooth=1.0, cl_exclude_first_channel=True)
    assert jnp.allclose(loss, ref_loss, rtol=5e-3, atol=1e-3), (loss, ref_loss)

    print("KERNEL_OK")
</pallas_src>

<mosaic_0001>
module attributes {stable_mosaic.version = 11 : i64} {
  func.func @_stats_kernel(%arg0: i32, %arg1: i32, %arg2: memref<1x1x16x16xf32, #tpu.memory_space<vmem>>, %arg3: memref<1x1x16x16xf32, #tpu.memory_space<vmem>>, %arg4: memref<1x4x8xf32, #tpu.memory_space<vmem>>) attributes {dimension_semantics = [#tpu.dimension_semantics<parallel>, #tpu.dimension_semantics<arbitrary>], iteration_bounds = array<i64: 2, 4>, scalar_prefetch = 0 : i64, scratch_operands = 0 : i64, tpu.core_type = #tpu.core_type<tc>, window_params = [{transform_indices = @transform_0, window_bounds = array<i64: 1, 1, 16, 16>}, {transform_indices = @transform_1, window_bounds = array<i64: 1, 1, 16, 16>}, {transform_indices = @transform_2, window_bounds = array<i64: 1, 4, 8>}]} {
    %c0 = arith.constant 0 : index
    %c0_0 = arith.constant 0 : index
    %c0_1 = arith.constant 0 : index
    %c0_2 = arith.constant 0 : index
    %0 = vector.load %arg2[%c0, %c0_0, %c0_1, %c0_2] : memref<1x1x16x16xf32, #tpu.memory_space<vmem>>, vector<1x1x16x16xf32>
    %1 = vector.shape_cast %0 : vector<1x1x16x16xf32> to vector<16x16xf32>
    %c0_3 = arith.constant 0 : index
    %c0_4 = arith.constant 0 : index
    %c0_5 = arith.constant 0 : index
    %c0_6 = arith.constant 0 : index
    %2 = vector.load %arg3[%c0_3, %c0_4, %c0_5, %c0_6] : memref<1x1x16x16xf32, #tpu.memory_space<vmem>>, vector<1x1x16x16xf32>
    %3 = vector.shape_cast %2 : vector<1x1x16x16xf32> to vector<16x16xf32>
    %4 = math.absf %1 : vector<16x16xf32>
    %cst = arith.constant 0.000000e+00 : f32
    %5 = vector.broadcast %cst : f32 to vector<16x16xf32>
    %6 = arith.subf %5, %4 : vector<16x16xf32>
    %7 = math.exp %6 : vector<16x16xf32>
    %cst_7 = arith.constant 1.000000e+00 : f32
    %8 = vector.broadcast %cst_7 : f32 to vector<16x16xf32>
    %9 = arith.addf %8, %7 : vector<16x16xf32>
    %10 = tpu.reciprocal %9 {approx = true} : vector<16x16xf32> -> vector<16x16xf32>
    %cst_8 = arith.constant 0.000000e+00 : f32
    %11 = vector.broadcast %cst_8 : f32 to vector<16x16xf32>
    %12 = arith.cmpf oge, %1, %11 : vector<16x16xf32>
    %13 = arith.mulf %7, %10 : vector<16x16xf32>
    %14 = arith.select %12, %10, %13 : vector<16x16xi1>, vector<16x16xf32>
    %cst_9 = arith.constant 0.000000e+00 : f32
    %15 = vector.broadcast %cst_9 : f32 to vector<16x16xf32>
    %16 = arith.maximumf %1, %15 : vector<16x16xf32>
    %17 = arith.mulf %1, %3 : vector<16x16xf32>
    %18 = arith.subf %16, %17 : vector<16x16xf32>
    %cst_10 = arith.constant 1.000000e+00 : f32
    %19 = vector.broadcast %cst_10 : f32 to vector<16x16xf32>
    %20 = arith.addf %19, %7 : vector<16x16xf32>
    %21 = math.log %20 : vector<16x16xf32>
    %22 = arith.addf %18, %21 : vector<16x16xf32>
    %cst_11 = arith.constant 1.000000e+30 : f32
    %23 = vector.broadcast %cst_11 : f32 to vector<1x16xf32>
    %24 = vector.extract_strided_slice %14 {offsets = [1, 0], sizes = [15, 16], strides = [1, 1]} : vector<16x16xf32> to vector<15x16xf32>
    %25 = tpu.concatenate %24, %23 in 0 : vector<15x16xf32>, vector<1x16xf32> -> vector<16x16xf32>
    %26 = arith.minimumf %25, %14 : vector<16x16xf32>
    %cst_12 = arith.constant 1.000000e+30 : f32
    %27 = vector.broadcast %cst_12 : f32 to vector<1x16xf32>
    %28 = vector.extract_strided_slice %14 {offsets = [0, 0], sizes = [15, 16], strides = [1, 1]} : vector<16x16xf32> to vector<15x16xf32>
    %29 = tpu.concatenate %27, %28 in 0 : vector<1x16xf32>, vector<15x16xf32> -> vector<16x16xf32>
    %30 = arith.minimumf %26, %29 : vector<16x16xf32>
    %cst_13 = arith.constant 1.000000e+30 : f32
    %31 = vector.broadcast %cst_13 : f32 to vector<16x1xf32>
    %32 = vector.extract_strided_slice %14 {offsets = [0, 1], sizes = [16, 15], strides = [1, 1]} : vector<16x16xf32> to vector<16x15xf32>
    %33 = tpu.concatenate %32, %31 in 1 : vector<16x15xf32>, vector<16x1xf32> -> vector<16x16xf32>
    %34 = arith.minimumf %33, %14 : vector<16x16xf32>
    %cst_14 = arith.constant 1.000000e+30 : f32
    %35 = vector.broadcast %cst_14 : f32 to vector<16x1xf32>
    %36 = vector.extract_strided_slice %14 {offsets = [0, 0], sizes = [16, 15], strides = [1, 1]} : vector<16x16xf32> to vector<16x15xf32>
    %37 = tpu.concatenate %35, %36 in 1 : vector<16x1xf32>, vector<16x15xf32> -> vector<16x16xf32>
    %38 = arith.minimumf %34, %37 : vector<16x16xf32>
    %39 = arith.minimumf %30, %38 : vector<16x16xf32>
    %cst_15 = arith.constant -1.000000e+30 : f32
    %40 = vector.broadcast %cst_15 : f32 to vector<1x16xf32>
    %41 = vector.extract_strided_slice %39 {offsets = [1, 0], sizes = [15, 16], strides = [1, 1]} : vector<16x16xf32> to vector<15x16xf32>
    %42 = tpu.concatenate %41, %40 in 0 : vector<15x16xf32>, vector<1x16xf32> -> vector<16x16xf32>
    %43 = arith.maximumf %42, %39 : vector<16x16xf32>
    %cst_16 = arith.constant -1.000000e+30 : f32
    %44 = vector.broadcast %cst_16 : f32 to vector<1x16xf32>
    %45 = vector.extract_strided_slice %39 {offsets = [0, 0], sizes = [15, 16], strides = [1, 1]} : vector<16x16xf32> to vector<15x16xf32>
    %46 = tpu.concatenate %44, %45 in 0 : vector<1x16xf32>, vector<15x16xf32> -> vector<16x16xf32>
    %47 = arith.maximumf %43, %46 : vector<16x16xf32>
    %cst_17 = arith.constant -1.000000e+30 : f32
    %48 = vector.broadcast %cst_17 : f32 to vector<16x1xf32>
    %49 = vector.extract_strided_slice %47 {offsets = [0, 1], sizes = [16, 15], strides = [1, 1]} : vector<16x16xf32> to vector<16x15xf32>
    %50 = tpu.concatenate %49, %48 in 1 : vector<16x15xf32>, vector<16x1xf32> -> vector<16x16xf32>
    %51 = arith.maximumf %50, %47 : vector<16x16xf32>
    %cst_18 = arith.constant -1.000000e+30 : f32
    %52 = vector.broadcast %cst_18 : f32 to vector<16x1xf32>
    %53 = vector.extract_strided_slice %47 {offsets = [0, 0], sizes = [16, 15], strides = [1, 1]} : vector<16x16xf32> to vector<16x15xf32>
    %54 = tpu.concatenate %52, %53 in 1 : vector<16x1xf32>, vector<16x15xf32> -> vector<16x16xf32>
    %55 = arith.maximumf %51, %54 : vector<16x16xf32>
    %56 = arith.subf %14, %55 : vector<16x16xf32>
    %cst_19 = arith.constant 0.000000e+00 : f32
    %57 = vector.broadcast %cst_19 : f32 to vector<16x16xf32>
    %58 = arith.maximumf %56, %57 : vector<16x16xf32>
    %cst_20 = arith.constant 1.000000e+30 : f32
    %59 = vector.broadcast %cst_20 : f32 to vector<1x16xf32>
    %60 = vector.extract_strided_slice %14 {offsets = [1, 0], sizes = [15, 16], strides = [1, 1]} : vector<16x16xf32> to vector<15x16xf32>
    %61 = tpu.concatenate %60, %59 in 0 : vector<15x16xf32>, vector<1x16xf32> -> vector<16x16xf32>
    %62 = arith.minimumf %61, %14 : vector<16x16xf32>
    %cst_21 = arith.constant 1.000000e+30 : f32
    %63 = vector.broadcast %cst_21 : f32 to vector<1x16xf32>
    %64 = vector.extract_strided_slice %14 {offsets = [0, 0], sizes = [15, 16], strides = [1, 1]} : vector<16x16xf32> to vector<15x16xf32>
    %65 = tpu.concatenate %63, %64 in 0 : vector<1x16xf32>, vector<15x16xf32> -> vector<16x16xf32>
    %66 = arith.minimumf %62, %65 : vector<16x16xf32>
    %cst_22 = arith.constant 1.000000e+30 : f32
    %67 = vector.broadcast %cst_22 : f32 to vector<16x1xf32>
    %68 = vector.extract_strided_slice %14 {offsets = [0, 1], sizes = [16, 15], strides = [1, 1]} : vector<16x16xf32> to vector<16x15xf32>
    %69 = tpu.concatenate %68, %67 in 1 : vector<16x15xf32>, vector<16x1xf32> -> vector<16x16xf32>
    %70 = arith.minimumf %69, %14 : vector<16x16xf32>
    %cst_23 = arith.constant 1.000000e+30 : f32
    %71 = vector.broadcast %cst_23 : f32 to vector<16x1xf32>
    %72 = vector.extract_strided_slice %14 {offsets = [0, 0], sizes = [16, 15], strides = [1, 1]} : vector<16x16xf32> to vector<16x15xf32>
    %73 = tpu.concatenate %71, %72 in 1 : vector<16x1xf32>, vector<16x15xf32> -> vector<16x16xf32>
    %74 = arith.minimumf %70, %73 : vector<16x16xf32>
    %75 = arith.minimumf %66, %74 : vector<16x16xf32>
    %cst_24 = arith.constant 1.000000e+30 : f32
    %76 = vector.broadcast %cst_24 : f32 to vector<1x16xf32>
    %77 = vector.extract_strided_slice %75 {offsets = [1, 0], sizes = [15, 16], strides = [1, 1]} : vector<16x16xf32> to vector<15x16xf32>
    %78 = tpu.concatenate %77, %76 in 0 : vector<15x16xf32>, vector<1x16xf32> -> vector<16x16xf32>
    %79 = arith.minimumf %78, %75 : vector<16x16xf32>
    %cst_25 = arith.constant 1.000000e+30 : f32
    %80 = vector.broadcast %cst_25 : f32 to vector<1x16xf32>
    %81 = vector.extract_strided_slice %75 {offsets = [0, 0], sizes = [15, 16], strides = [1, 1]} : vector<16x16xf32> to vector<15x16xf32>
    %82 = tpu.concatenate %80, %81 in 0 : vector<1x16xf32>, vector<15x16xf32> -> vector<16x16xf32>
    %83 = arith.minimumf %79, %82 : vector<16x16xf32>
    %cst_26 = arith.constant 1.000000e+30 : f32
    %84 = vector.broadcast %cst_26 : f32 to vector<16x1xf32>
    %85 = vector.extract_strided_slice %75 {offsets = [0, 1], sizes = [16, 15], strides = [1, 1]} : vector<16x16xf32> to vector<16x15xf32>
    %86 = tpu.concatenate %85, %84 in 1 : vector<16x15xf32>, vector<16x1xf32> -> vector<16x16xf32>
    %87 = arith.minimumf %86, %75 : vector<16x16xf32>
    %cst_27 = arith.constant 1.000000e+30 : f32
    %88 = vector.broadcast %cst_27 : f32 to vector<16x1xf32>
    %89 = vector.extract_strided_slice %75 {offsets = [0, 0], sizes = [16, 15], strides = [1, 1]} : vector<16x16xf32> to vector<16x15xf32>
    %90 = tpu.concatenate %88, %89 in 1 : vector<16x1xf32>, vector<16x15xf32> -> vector<16x16xf32>
    %91 = arith.minimumf %87, %90 : vector<16x16xf32>
    %92 = arith.minimumf %83, %91 : vector<16x16xf32>
    %cst_28 = arith.constant -1.000000e+30 : f32
    %93 = vector.broadcast %cst_28 : f32 to vector<1x16xf32>
    %94 = vector.extract_strided_slice %92 {offsets = [1, 0], sizes = [15, 16], strides = [1, 1]} : vector<16x16xf32> to vector<15x16xf32>
    %95 = tpu.concatenate %94, %93 in 0 : vector<15x16xf32>, vector<1x16xf32> -> vector<16x16xf32>
    %96 = arith.maximumf %95, %92 : vector<16x16xf32>
    %cst_29 = arith.constant -1.000000e+30 : f32
    %97 = vector.broadcast %cst_29 : f32 to vector<1x16xf32>
    %98 = vector.extract_strided_slice %92 {offsets = [0, 0], sizes = [15, 16], strides = [1, 1]} : vector<16x16xf32> to vector<15x16xf32>
    %99 = tpu.concatenate %97, %98 in 0 : vector<1x16xf32>, vector<15x16xf32> -> vector<16x16xf32>
    %100 = arith.maximumf %96, %99 : vector<16x16xf32>
    %cst_30 = arith.constant -1.000000e+30 : f32
    %101 = vector.broadcast %cst_30 : f32 to vector<16x1xf32>
    %102 = vector.extract_strided_slice %100 {offsets = [0, 1], sizes = [16, 15], strides = [1, 1]} : vector<16x16xf32> to vector<16x15xf32>
    %103 = tpu.concatenate %102, %101 in 1 : vector<16x15xf32>, vector<16x1xf32> -> vector<16x16xf32>
    %104 = arith.maximumf %103, %100 : vector<16x16xf32>
    %cst_31 = arith.constant -1.000000e+30 : f32
    %105 = vector.broadcast %cst_31 : f32 to vector<16x1xf32>
    %106 = vector.extract_strided_slice %100 {offsets = [0, 0], sizes = [16, 15], strides = [1, 1]} : vector<16x16xf32> to vector<16x15xf32>
    %107 = tpu.concatenate %105, %106 in 1 : vector<16x1xf32>, vector<16x15xf32> -> vector<16x16xf32>
    %108 = arith.maximumf %104, %107 : vector<16x16xf32>
    %109 = arith.subf %75, %108 : vector<16x16xf32>
    %cst_32 = arith.constant 0.000000e+00 : f32
    %110 = vector.broadcast %cst_32 : f32 to vector<16x16xf32>
    %111 = arith.maximumf %109, %110 : vector<16x16xf32>
    %112 = arith.mulf %58, %111 : vector<16x16xf32>
    %113 = arith.subf %111, %112 : vector<16x16xf32>
    %cst_33 = arith.constant 0.000000e+00 : f32
    %114 = vector.broadcast %cst_33 : f32 to vector<16x16xf32>
    %115 = arith.maximumf %113, %114 : vector<16x16xf32>
    %116 = arith.addf %58, %115 : vector<16x16xf32>
    %cst_34 = arith.constant 1.000000e+30 : f32
    %117 = vector.broadcast %cst_34 : f32 to vector<1x16xf32>
    %118 = vector.extract_strided_slice %75 {offsets = [1, 0], sizes = [15, 16], strides = [1, 1]} : vector<16x16xf32> to vector<15x16xf32>
    %119 = tpu.concatenate %118, %117 in 0 : vector<15x16xf32>, vector<1x16xf32> -> vector<16x16xf32>
    %120 = arith.minimumf %119, %75 : vector<16x16xf32>
    %cst_35 = arith.constant 1.000000e+30 : f32
    %121 = vector.broadcast %cst_35 : f32 to vector<1x16xf32>
    %122 = vector.extract_strided_slice %75 {offsets = [0, 0], sizes = [15, 16], strides = [1, 1]} : vector<16x16xf32> to vector<15x16xf32>
    %123 = tpu.concatenate %121, %122 in 0 : vector<1x16xf32>, vector<15x16xf32> -> vector<16x16xf32>
    %124 = arith.minimumf %120, %123 : vector<16x16xf32>
    %cst_36 = arith.constant 1.000000e+30 : f32
    %125 = vector.broadcast %cst_36 : f32 to vector<16x1xf32>
    %126 = vector.extract_strided_slice %75 {offsets = [0, 1], sizes = [16, 15], strides = [1, 1]} : vector<16x16xf32> to vector<16x15xf32>
    %127 = tpu.concatenate %126, %125 in 1 : vector<16x15xf32>, vector<16x1xf32> -> vector<16x16xf32>
    %128 = arith.minimumf %127, %75 : vector<16x16xf32>
    %cst_37 = arith.constant 1.000000e+30 : f32
    %129 = vector.broadcast %cst_37 : f32 to vector<16x1xf32>
    %130 = vector.extract_strided_slice %75 {offsets = [0, 0], sizes = [16, 15], strides = [1, 1]} : vector<16x16xf32> to vector<16x15xf32>
    %131 = tpu.concatenate %129, %130 in 1 : vector<16x1xf32>, vector<16x15xf32> -> vector<16x16xf32>
    %132 = arith.minimumf %128, %131 : vector<16x16xf32>
    %133 = arith.minimumf %124, %132 : vector<16x16xf32>
    %cst_38 = arith.constant 1.000000e+30 : f32
    %134 = vector.broadcast %cst_38 : f32 to vector<1x16xf32>
    %135 = vector.extract_strided_slice %133 {offsets = [1, 0], sizes = [15, 16], strides = [1, 1]} : vector<16x16xf32> to vector<15x16xf32>
    %136 = tpu.concatenate %135, %134 in 0 : vector<15x16xf32>, vector<1x16xf32> -> vector<16x16xf32>
    %137 = arith.minimumf %136, %133 : vector<16x16xf32>
    %cst_39 = arith.constant 1.000000e+30 : f32
    %138 = vector.broadcast %cst_39 : f32 to vector<1x16xf32>
    %139 = vector.extract_strided_slice %133 {offsets = [0, 0], sizes = [15, 16], strides = [1, 1]} : vector<16x16xf32> to vector<15x16xf32>
    %140 = tpu.concatenate %138, %139 in 0 : vector<1x16xf32>, vector<15x16xf32> -> vector<16x16xf32>
    %141 = arith.minimumf %137, %140 : vector<16x16xf32>
    %cst_40 = arith.constant 1.000000e+30 : f32
    %142 = vector.broadcast %cst_40 : f32 to vector<16x1xf32>
    %143 = vector.extract_strided_slice %133 {offsets = [0, 1], sizes = [16, 15], strides = [1, 1]} : vector<16x16xf32> to vector<16x15xf32>
    %144 = tpu.concatenate %143, %142 in 1 : vector<16x15xf32>, vector<16x1xf32> -> vector<16x16xf32>
    %145 = arith.minimumf %144, %133 : vector<16x16xf32>
    %cst_41 = arith.constant 1.000000e+30 : f32
    %146 = vector.broadcast %cst_41 : f32 to vector<16x1xf32>
    %147 = vector.extract_strided_slice %133 {offsets = [0, 0], sizes = [16, 15], strides = [1, 1]} : vector<16x16xf32> to vector<16x15xf32>
    %148 = tpu.concatenate %146, %147 in 1 : vector<16x1xf32>, vector<16x15xf32> -> vector<16x16xf32>
    %149 = arith.minimumf %145, %148 : vector<16x16xf32>
    %150 = arith.minimumf %141, %149 : vector<16x16xf32>
    %cst_42 = arith.constant -1.000000e+30 : f32
    %151 = vector.broadcast %cst_42 : f32 to vector<1x16xf32>
    %152 = vector.extract_strided_slice %150 {offsets = [1, 0], sizes = [15, 16], strides = [1, 1]} : vector<16x16xf32> to vector<15x16xf32>
    %153 = tpu.concatenate %152, %151 in 0 : vector<15x16xf32>, vector<1x16xf32> -> vector<16x16xf32>
    %154 = arith.maximumf %153, %150 : vector<16x16xf32>
    %cst_43 = arith.constant -1.000000e+30 : f32
    %155 = vector.broadcast %cst_43 : f32 to vector<1x16xf32>
    %156 = vector.extract_strided_slice %150 {offsets = [0, 0], sizes = [15, 16], strides = [1, 1]} : vector<16x16xf32> to vector<15x16xf32>
    %157 = tpu.concatenate %155, %156 in 0 : vector<1x16xf32>, vector<15x16xf32> -> vector<16x16xf32>
    %158 = arith.maximumf %154, %157 : vector<16x16xf32>
    %cst_44 = arith.constant -1.000000e+30 : f32
    %159 = vector.broadcast %cst_44 : f32 to vector<16x1xf32>
    %160 = vector.extract_strided_slice %158 {offsets = [0, 1], sizes = [16, 15], strides = [1, 1]} : vector<16x16xf32> to vector<16x15xf32>
    %161 = tpu.concatenate %160, %159 in 1 : vector<16x15xf32>, vector<16x1xf32> -> vector<16x16xf32>
    %162 = arith.maximumf %161, %158 : vector<16x16xf32>
    %cst_45 = arith.constant -1.000000e+30 : f32
    %163 = vector.broadcast %cst_45 : f32 to vector<16x1xf32>
    %164 = vector.extract_strided_slice %158 {offsets = [0, 0], sizes = [16, 15], strides = [1, 1]} : vector<16x16xf32> to vector<16x15xf32>
    %165 = tpu.concatenate %163, %164 in 1 : vector<16x1xf32>, vector<16x15xf32> -> vector<16x16xf32>
    %166 = arith.maximumf %162, %165 : vector<16x16xf32>
    %167 = arith.subf %133, %166 : vector<16x16xf32>
    %cst_46 = arith.constant 0.000000e+00 : f32
    %168 = vector.broadcast %cst_46 : f32 to vector<16x16xf32>
    %169 = arith.maximumf %167, %168 : vector<16x16xf32>
    %170 = arith.mulf %116, %169 : vector<16x16xf32>
    %171 = arith.subf %169, %170 : vector<16x16xf32>
    %cst_47 = arith.constant 0.000000e+00 : f32
    %172 = vector.broadcast %cst_47 : f32 to vector<16x16xf32>
    %173 = arith.maximumf %171, %172 : vector<16x16xf32>
    %174 = arith.addf %116, %173 : vector<16x16xf32>
    %cst_48 = arith.constant 1.000000e+30 : f32
    %175 = vector.broadcast %cst_48 : f32 to vector<1x16xf32>
    %176 = vector.extract_strided_slice %133 {offsets = [1, 0], sizes = [15, 16], strides = [1, 1]} : vector<16x16xf32> to vector<15x16xf32>
    %177 = tpu.concatenate %176, %175 in 0 : vector<15x16xf32>, vector<1x16xf32> -> vector<16x16xf32>
    %178 = arith.minimumf %177, %133 : vector<16x16xf32>
    %cst_49 = arith.constant 1.000000e+30 : f32
    %179 = vector.broadcast %cst_49 : f32 to vector<1x16xf32>
    %180 = vector.extract_strided_slice %133 {offsets = [0, 0], sizes = [15, 16], strides = [1, 1]} : vector<16x16xf32> to vector<15x16xf32>
    %181 = tpu.concatenate %179, %180 in 0 : vector<1x16xf32>, vector<15x16xf32> -> vector<16x16xf32>
    %182 = arith.minimumf %178, %181 : vector<16x16xf32>
    %cst_50 = arith.constant 1.000000e+30 : f32
    %183 = vector.broadcast %cst_50 : f32 to vector<16x1xf32>
    %184 = vector.extract_strided_slice %133 {offsets = [0, 1], sizes = [16, 15], strides = [1, 1]} : vector<16x16xf32> to vector<16x15xf32>
    %185 = tpu.concatenate %184, %183 in 1 : vector<16x15xf32>, vector<16x1xf32> -> vector<16x16xf32>
    %186 = arith.minimumf %185, %133 : vector<16x16xf32>
    %cst_51 = arith.constant 1.000000e+30 : f32
    %187 = vector.broadcast %cst_51 : f32 to vector<16x1xf32>
    %188 = vector.extract_strided_slice %133 {offsets = [0, 0], sizes = [16, 15], strides = [1, 1]} : vector<16x16xf32> to vector<16x15xf32>
    %189 = tpu.concatenate %187, %188 in 1 : vector<16x1xf32>, vector<16x15xf32> -> vector<16x16xf32>
    %190 = arith.minimumf %186, %189 : vector<16x16xf32>
    %191 = arith.minimumf %182, %190 : vector<16x16xf32>
    %cst_52 = arith.constant 1.000000e+30 : f32
    %192 = vector.broadcast %cst_52 : f32 to vector<1x16xf32>
    %193 = vector.extract_strided_slice %191 {offsets = [1, 0], sizes = [15, 16], strides = [1, 1]} : vector<16x16xf32> to vector<15x16xf32>
    %194 = tpu.concatenate %193, %192 in 0 : vector<15x16xf32>, vector<1x16xf32> -> vector<16x16xf32>
    %195 = arith.minimumf %194, %191 : vector<16x16xf32>
    %cst_53 = arith.constant 1.000000e+30 : f32
    %196 = vector.broadcast %cst_53 : f32 to vector<1x16xf32>
    %197 = vector.extract_strided_slice %191 {offsets = [0, 0], sizes = [15, 16], strides = [1, 1]} : vector<16x16xf32> to vector<15x16xf32>
    %198 = tpu.concatenate %196, %197 in 0 : vector<1x16xf32>, vector<15x16xf32> -> vector<16x16xf32>
    %199 = arith.minimumf %195, %198 : vector<16x16xf32>
    %cst_54 = arith.constant 1.000000e+30 : f32
    %200 = vector.broadcast %cst_54 : f32 to vector<16x1xf32>
    %201 = vector.extract_strided_slice %191 {offsets = [0, 1], sizes = [16, 15], strides = [1, 1]} : vector<16x16xf32> to vector<16x15xf32>
    %202 = tpu.concatenate %201, %200 in 1 : vector<16x15xf32>, vector<16x1xf32> -> vector<16x16xf32>
    %203 = arith.minimumf %202, %191 : vector<16x16xf32>
    %cst_55 = arith.constant 1.000000e+30 : f32
    %204 = vector.broadcast %cst_55 : f32 to vector<16x1xf32>
    %205 = vector.extract_strided_slice %191 {offsets = [0, 0], sizes = [16, 15], strides = [1, 1]} : vector<16x16xf32> to vector<16x15xf32>
    %206 = tpu.concatenate %204, %205 in 1 : vector<16x1xf32>, vector<16x15xf32> -> vector<16x16xf32>
    %207 = arith.minimumf %203, %206 : vector<16x16xf32>
    %208 = arith.minimumf %199, %207 : vector<16x16xf32>
    %cst_56 = arith.constant -1.000000e+30 : f32
    %209 = vector.broadcast %cst_56 : f32 to vector<1x16xf32>
    %210 = vector.extract_strided_slice %208 {offsets = [1, 0], sizes = [15, 16], strides = [1, 1]} : vector<16x16xf32> to vector<15x16xf32>
    %211 = tpu.concatenate %210, %209 in 0 : vector<15x16xf32>, vector<1x16xf32> -> vector<16x16xf32>
    %212 = arith.maximumf %211, %208 : vector<16x16xf32>
    %cst_57 = arith.constant -1.000000e+30 : f32
    %213 = vector.broadcast %cst_57 : f32 to vector<1x16xf32>
    %214 = vector.extract_strided_slice %208 {offsets = [0, 0], sizes = [15, 16], strides = [1, 1]} : vector<16x16xf32> to vector<15x16xf32>
    %215 = tpu.concatenate %213, %214 in 0 : vector<1x16xf32>, vector<15x16xf32> -> vector<16x16xf32>
    %216 = arith.maximumf %212, %215 : vector<16x16xf32>
    %cst_58 = arith.constant -1.000000e+30 : f32
    %217 = vector.broadcast %cst_58 : f32 to vector<16x1xf32>
    %218 = vector.extract_strided_slice %216 {offsets = [0, 1], sizes = [16, 15], strides = [1, 1]} : vector<16x16xf32> to vector<16x15xf32>
    %219 = tpu.concatenate %218, %217 in 1 : vector<16x15xf32>, vector<16x1xf32> -> vector<16x16xf32>
    %220 = arith.maximumf %219, %216 : vector<16x16xf32>
    %cst_59 = arith.constant -1.000000e+30 : f32
    %221 = vector.broadcast %cst_59 : f32 to vector<16x1xf32>
    %222 = vector.extract_strided_slice %216 {offsets = [0, 0], sizes = [16, 15], strides = [1, 1]} : vector<16x16xf32> to vector<16x15xf32>
    %223 = tpu.concatenate %221, %222 in 1 : vector<16x1xf32>, vector<16x15xf32> -> vector<16x16xf32>
    %224 = arith.maximumf %220, %223 : vector<16x16xf32>
    %225 = arith.subf %191, %224 : vector<16x16xf32>
    %cst_60 = arith.constant 0.000000e+00 : f32
    %226 = vector.broadcast %cst_60 : f32 to vector<16x16xf32>
    %227 = arith.maximumf %225, %226 : vector<16x16xf32>
    %228 = arith.mulf %174, %227 : vector<16x16xf32>
    %229 = arith.subf %227, %228 : vector<16x16xf32>
    %cst_61 = arith.constant 0.000000e+00 : f32
    %230 = vector.broadcast %cst_61 : f32 to vector<16x16xf32>
    %231 = arith.maximumf %229, %230 : vector<16x16xf32>
    %232 = arith.addf %174, %231 : vector<16x16xf32>
    %cst_62 = arith.constant 1.000000e+30 : f32
    %233 = vector.broadcast %cst_62 : f32 to vector<1x16xf32>
    %234 = vector.extract_strided_slice %3 {offsets = [1, 0], sizes = [15, 16], strides = [1, 1]} : vector<16x16xf32> to vector<15x16xf32>
    %235 = tpu.concatenate %234, %233 in 0 : vector<15x16xf32>, vector<1x16xf32> -> vector<16x16xf32>
    %236 = arith.minimumf %235, %3 : vector<16x16xf32>
    %cst_63 = arith.constant 1.000000e+30 : f32
    %237 = vector.broadcast %cst_63 : f32 to vector<1x16xf32>
    %238 = vector.extract_strided_slice %3 {offsets = [0, 0], sizes = [15, 16], strides = [1, 1]} : vector<16x16xf32> to vector<15x16xf32>
    %239 = tpu.concatenate %237, %238 in 0 : vector<1x16xf32>, vector<15x16xf32> -> vector<16x16xf32>
    %240 = arith.minimumf %236, %239 : vector<16x16xf32>
    %cst_64 = arith.constant 1.000000e+30 : f32
    %241 = vector.broadcast %cst_64 : f32 to vector<16x1xf32>
    %242 = vector.extract_strided_slice %3 {offsets = [0, 1], sizes = [16, 15], strides = [1, 1]} : vector<16x16xf32> to vector<16x15xf32>
    %243 = tpu.concatenate %242, %241 in 1 : vector<16x15xf32>, vector<16x1xf32> -> vector<16x16xf32>
    %244 = arith.minimumf %243, %3 : vector<16x16xf32>
    %cst_65 = arith.constant 1.000000e+30 : f32
    %245 = vector.broadcast %cst_65 : f32 to vector<16x1xf32>
    %246 = vector.extract_strided_slice %3 {offsets = [0, 0], sizes = [16, 15], strides = [1, 1]} : vector<16x16xf32> to vector<16x15xf32>
    %247 = tpu.concatenate %245, %246 in 1 : vector<16x1xf32>, vector<16x15xf32> -> vector<16x16xf32>
    %248 = arith.minimumf %244, %247 : vector<16x16xf32>
    %249 = arith.minimumf %240, %248 : vector<16x16xf32>
    %cst_66 = arith.constant -1.000000e+30 : f32
    %250 = vector.broadcast %cst_66 : f32 to vector<1x16xf32>
    %251 = vector.extract_strided_slice %249 {offsets = [1, 0], sizes = [15, 16], strides = [1, 1]} : vector<16x16xf32> to vector<15x16xf32>
    %252 = tpu.concatenate %251, %250 in 0 : vector<15x16xf32>, vector<1x16xf32> -> vector<16x16xf32>
    %253 = arith.maximumf %252, %249 : vector<16x16xf32>
    %cst_67 = arith.constant -1.000000e+30 : f32
    %254 = vector.broadcast %cst_67 : f32 to vector<1x16xf32>
    %255 = vector.extract_strided_slice %249 {offsets = [0, 0], sizes = [15, 16], strides = [1, 1]} : vector<16x16xf32> to vector<15x16xf32>
    %256 = tpu.concatenate %254, %255 in 0 : vector<1x16xf32>, vector<15x16xf32> -> vector<16x16xf32>
    %257 = arith.maximumf %253, %256 : vector<16x16xf32>
    %cst_68 = arith.constant -1.000000e+30 : f32
    %258 = vector.broadcast %cst_68 : f32 to vector<16x1xf32>
    %259 = vector.extract_strided_slice %257 {offsets = [0, 1], sizes = [16, 15], strides = [1, 1]} : vector<16x16xf32> to vector<16x15xf32>
    %260 = tpu.concatenate %259, %258 in 1 : vector<16x15xf32>, vector<16x1xf32> -> vector<16x16xf32>
    %261 = arith.maximumf %260, %257 : vector<16x16xf32>
    %cst_69 = arith.constant -1.000000e+30 : f32
    %262 = vector.broadcast %cst_69 : f32 to vector<16x1xf32>
    %263 = vector.extract_strided_slice %257 {offsets = [0, 0], sizes = [16, 15], strides = [1, 1]} : vector<16x16xf32> to vector<16x15xf32>
    %264 = tpu.concatenate %262, %263 in 1 : vector<16x1xf32>, vector<16x15xf32> -> vector<16x16xf32>
    %265 = arith.maximumf %261, %264 : vector<16x16xf32>
    %266 = arith.subf %3, %265 : vector<16x16xf32>
    %cst_70 = arith.constant 0.000000e+00 : f32
    %267 = vector.broadcast %cst_70 : f32 to vector<16x16xf32>
    %268 = arith.maximumf %266, %267 : vector<16x16xf32>
    %cst_71 = arith.constant 1.000000e+30 : f32
    %269 = vector.broadcast %cst_71 : f32 to vector<1x16xf32>
    %270 = vector.extract_strided_slice %3 {offsets = [1, 0], sizes = [15, 16], strides = [1, 1]} : vector<16x16xf32> to vector<15x16xf32>
    %271 = tpu.concatenate %270, %269 in 0 : vector<15x16xf32>, vector<1x16xf32> -> vector<16x16xf32>
    %272 = arith.minimumf %271, %3 : vector<16x16xf32>
    %cst_72 = arith.constant 1.000000e+30 : f32
    %273 = vector.broadcast %cst_72 : f32 to vector<1x16xf32>
    %274 = vector.extract_strided_slice %3 {offsets = [0, 0], sizes = [15, 16], strides = [1, 1]} : vector<16x16xf32> to vector<15x16xf32>
    %275 = tpu.concatenate %273, %274 in 0 : vector<1x16xf32>, vector<15x16xf32> -> vector<16x16xf32>
    %276 = arith.minimumf %272, %275 : vector<16x16xf32>
    %cst_73 = arith.constant 1.000000e+30 : f32
    %277 = vector.broadcast %cst_73 : f32 to vector<16x1xf32>
    %278 = vector.extract_strided_slice %3 {offsets = [0, 1], sizes = [16, 15], strides = [1, 1]} : vector<16x16xf32> to vector<16x15xf32>
    %279 = tpu.concatenate %278, %277 in 1 : vector<16x15xf32>, vector<16x1xf32> -> vector<16x16xf32>
    %280 = arith.minimumf %279, %3 : vector<16x16xf32>
    %cst_74 = arith.constant 1.000000e+30 : f32
    %281 = vector.broadcast %cst_74 : f32 to vector<16x1xf32>
    %282 = vector.extract_strided_slice %3 {offsets = [0, 0], sizes = [16, 15], strides = [1, 1]} : vector<16x16xf32> to vector<16x15xf32>
    %283 = tpu.concatenate %281, %282 in 1 : vector<16x1xf32>, vector<16x15xf32> -> vector<16x16xf32>
    %284 = arith.minimumf %280, %283 : vector<16x16xf32>
    %285 = arith.minimumf %276, %284 : vector<16x16xf32>
    %cst_75 = arith.constant 1.000000e+30 : f32
    %286 = vector.broadcast %cst_75 : f32 to vector<1x16xf32>
    %287 = vector.extract_strided_slice %285 {offsets = [1, 0], sizes = [15, 16], strides = [1, 1]} : vector<16x16xf32> to vector<15x16xf32>
    %288 = tpu.concatenate %287, %286 in 0 : vector<15x16xf32>, vector<1x16xf32> -> vector<16x16xf32>
    %289 = arith.minimumf %288, %285 : vector<16x16xf32>
    %cst_76 = arith.constant 1.000000e+30 : f32
    %290 = vector.broadcast %cst_76 : f32 to vector<1x16xf32>
    %291 = vector.extract_strided_slice %285 {offsets = [0, 0], sizes = [15, 16], strides = [1, 1]} : vector<16x16xf32> to vector<15x16xf32>
    %292 = tpu.concatenate %290, %291 in 0 : vector<1x16xf32>, vector<15x16xf32> -> vector<16x16xf32>
    %293 = arith.minimumf %289, %292 : vector<16x16xf32>
    %cst_77 = arith.constant 1.000000e+30 : f32
    %294 = vector.broadcast %cst_77 : f32 to vector<16x1xf32>
    %295 = vector.extract_strided_slice %285 {offsets = [0, 1], sizes = [16, 15], strides = [1, 1]} : vector<16x16xf32> to vector<16x15xf32>
    %296 = tpu.concatenate %295, %294 in 1 : vector<16x15xf32>, vector<16x1xf32> -> vector<16x16xf32>
    %297 = arith.minimumf %296, %285 : vector<16x16xf32>
    %cst_78 = arith.constant 1.000000e+30 : f32
    %298 = vector.broadcast %cst_78 : f32 to vector<16x1xf32>
    %299 = vector.extract_strided_slice %285 {offsets = [0, 0], sizes = [16, 15], strides = [1, 1]} : vector<16x16xf32> to vector<16x15xf32>
    %300 = tpu.concatenate %298, %299 in 1 : vector<16x1xf32>, vector<16x15xf32> -> vector<16x16xf32>
    %301 = arith.minimumf %297, %300 : vector<16x16xf32>
    %302 = arith.minimumf %293, %301 : vector<16x16xf32>
    %cst_79 = arith.constant -1.000000e+30 : f32
    %303 = vector.broadcast %cst_79 : f32 to vector<1x16xf32>
    %304 = vector.extract_strided_slice %302 {offsets = [1, 0], sizes = [15, 16], strides = [1, 1]} : vector<16x16xf32> to vector<15x16xf32>
    %305 = tpu.concatenate %304, %303 in 0 : vector<15x16xf32>, vector<1x16xf32> -> vector<16x16xf32>
    %306 = arith.maximumf %305, %302 : vector<16x16xf32>
    %cst_80 = arith.constant -1.000000e+30 : f32
    %307 = vector.broadcast %cst_80 : f32 to vector<1x16xf32>
    %308 = vector.extract_strided_slice %302 {offsets = [0, 0], sizes = [15, 16], strides = [1, 1]} : vector<16x16xf32> to vector<15x16xf32>
    %309 = tpu.concatenate %307, %308 in 0 : vector<1x16xf32>, vector<15x16xf32> -> vector<16x16xf32>
    %310 = arith.maximumf %306, %309 : vector<16x16xf32>
    %cst_81 = arith.constant -1.000000e+30 : f32
    %311 = vector.broadcast %cst_81 : f32 to vector<16x1xf32>
    %312 = vector.extract_strided_slice %310 {offsets = [0, 1], sizes = [16, 15], strides = [1, 1]} : vector<16x16xf32> to vector<16x15xf32>
    %313 = tpu.concatenate %312, %311 in 1 : vector<16x15xf32>, vector<16x1xf32> -> vector<16x16xf32>
    %314 = arith.maximumf %313, %310 : vector<16x16xf32>
    %cst_82 = arith.constant -1.000000e+30 : f32
    %315 = vector.broadcast %cst_82 : f32 to vector<16x1xf32>
    %316 = vector.extract_strided_slice %310 {offsets = [0, 0], sizes = [16, 15], strides = [1, 1]} : vector<16x16xf32> to vector<16x15xf32>
    %317 = tpu.concatenate %315, %316 in 1 : vector<16x1xf32>, vector<16x15xf32> -> vector<16x16xf32>
    %318 = arith.maximumf %314, %317 : vector<16x16xf32>
    %319 = arith.subf %285, %318 : vector<16x16xf32>
    %cst_83 = arith.constant 0.000000e+00 : f32
    %320 = vector.broadcast %cst_83 : f32 to vector<16x16xf32>
    %321 = arith.maximumf %319, %320 : vector<16x16xf32>
    %322 = arith.mulf %268, %321 : vector<16x16xf32>
    %323 = arith.subf %321, %322 : vector<16x16xf32>
    %cst_84 = arith.constant 0.000000e+00 : f32
    %324 = vector.broadcast %cst_84 : f32 to vector<16x16xf32>
    %325 = arith.maximumf %323, %324 : vector<16x16xf32>
    %326 = arith.addf %268, %325 : vector<16x16xf32>
    %cst_85 = arith.constant 1.000000e+30 : f32
    %327 = vector.broadcast %cst_85 : f32 to vector<1x16xf32>
    %328 = vector.extract_strided_slice %285 {offsets = [1, 0], sizes = [15, 16], strides = [1, 1]} : vector<16x16xf32> to vector<15x16xf32>
    %329 = tpu.concatenate %328, %327 in 0 : vector<15x16xf32>, vector<1x16xf32> -> vector<16x16xf32>
    %330 = arith.minimumf %329, %285 : vector<16x16xf32>
    %cst_86 = arith.constant 1.000000e+30 : f32
    %331 = vector.broadcast %cst_86 : f32 to vector<1x16xf32>
    %332 = vector.extract_strided_slice %285 {offsets = [0, 0], sizes = [15, 16], strides = [1, 1]} : vector<16x16xf32> to vector<15x16xf32>
    %333 = tpu.concatenate %331, %332 in 0 : vector<1x16xf32>, vector<15x16xf32> -> vector<16x16xf32>
    %334 = arith.minimumf %330, %333 : vector<16x16xf32>
    %cst_87 = arith.constant 1.000000e+30 : f32
    %335 = vector.broadcast %cst_87 : f32 to vector<16x1xf32>
    %336 = vector.extract_strided_slice %285 {offsets = [0, 1], sizes = [16, 15], strides = [1, 1]} : vector<16x16xf32> to vector<16x15xf32>
    %337 = tpu.concatenate %336, %335 in 1 : vector<16x15xf32>, vector<16x1xf32> -> vector<16x16xf32>
    %338 = arith.minimumf %337, %285 : vector<16x16xf32>
    %cst_88 = arith.constant 1.000000e+30 : f32
    %339 = vector.broadcast %cst_88 : f32 to vector<16x1xf32>
    %340 = vector.extract_strided_slice %285 {offsets = [0, 0], sizes = [16, 15], strides = [1, 1]} : vector<16x16xf32> to vector<16x15xf32>
    %341 = tpu.concatenate %339, %340 in 1 : vector<16x1xf32>, vector<16x15xf32> -> vector<16x16xf32>
    %342 = arith.minimumf %338, %341 : vector<16x16xf32>
    %343 = arith.minimumf %334, %342 : vector<16x16xf32>
    %cst_89 = arith.constant 1.000000e+30 : f32
    %344 = vector.broadcast %cst_89 : f32 to vector<1x16xf32>
    %345 = vector.extract_strided_slice %343 {offsets = [1, 0], sizes = [15, 16], strides = [1, 1]} : vector<16x16xf32> to vector<15x16xf32>
    %346 = tpu.concatenate %345, %344 in 0 : vector<15x16xf32>, vector<1x16xf32> -> vector<16x16xf32>
    %347 = arith.minimumf %346, %343 : vector<16x16xf32>
    %cst_90 = arith.constant 1.000000e+30 : f32
    %348 = vector.broadcast %cst_90 : f32 to vector<1x16xf32>
    %349 = vector.extract_strided_slice %343 {offsets = [0, 0], sizes = [15, 16], strides = [1, 1]} : vector<16x16xf32> to vector<15x16xf32>
    %350 = tpu.concatenate %348, %349 in 0 : vector<1x16xf32>, vector<15x16xf32> -> vector<16x16xf32>
    %351 = arith.minimumf %347, %350 : vector<16x16xf32>
    %cst_91 = arith.constant 1.000000e+30 : f32
    %352 = vector.broadcast %cst_91 : f32 to vector<16x1xf32>
    %353 = vector.extract_strided_slice %343 {offsets = [0, 1], sizes = [16, 15], strides = [1, 1]} : vector<16x16xf32> to vector<16x15xf32>
    %354 = tpu.concatenate %353, %352 in 1 : vector<16x15xf32>, vector<16x1xf32> -> vector<16x16xf32>
    %355 = arith.minimumf %354, %343 : vector<16x16xf32>
    %cst_92 = arith.constant 1.000000e+30 : f32
    %356 = vector.broadcast %cst_92 : f32 to vector<16x1xf32>
    %357 = vector.extract_strided_slice %343 {offsets = [0, 0], sizes = [16, 15], strides = [1, 1]} : vector<16x16xf32> to vector<16x15xf32>
    %358 = tpu.concatenate %356, %357 in 1 : vector<16x1xf32>, vector<16x15xf32> -> vector<16x16xf32>
    %359 = arith.minimumf %355, %358 : vector<16x16xf32>
    %360 = arith.minimumf %351, %359 : vector<16x16xf32>
    %cst_93 = arith.constant -1.000000e+30 : f32
    %361 = vector.broadcast %cst_93 : f32 to vector<1x16xf32>
    %362 = vector.extract_strided_slice %360 {offsets = [1, 0], sizes = [15, 16], strides = [1, 1]} : vector<16x16xf32> to vector<15x16xf32>
    %363 = tpu.concatenate %362, %361 in 0 : vector<15x16xf32>, vector<1x16xf32> -> vector<16x16xf32>
    %364 = arith.maximumf %363, %360 : vector<16x16xf32>
    %cst_94 = arith.constant -1.000000e+30 : f32
    %365 = vector.broadcast %cst_94 : f32 to vector<1x16xf32>
    %366 = vector.extract_strided_slice %360 {offsets = [0, 0], sizes = [15, 16], strides = [1, 1]} : vector<16x16xf32> to vector<15x16xf32>
    %367 = tpu.concatenate %365, %366 in 0 : vector<1x16xf32>, vector<15x16xf32> -> vector<16x16xf32>
    %368 = arith.maximumf %364, %367 : vector<16x16xf32>
    %cst_95 = arith.constant -1.000000e+30 : f32
    %369 = vector.broadcast %cst_95 : f32 to vector<16x1xf32>
    %370 = vector.extract_strided_slice %368 {offsets = [0, 1], sizes = [16, 15], strides = [1, 1]} : vector<16x16xf32> to vector<16x15xf32>
    %371 = tpu.concatenate %370, %369 in 1 : vector<16x15xf32>, vector<16x1xf32> -> vector<16x16xf32>
    %372 = arith.maximumf %371, %368 : vector<16x16xf32>
    %cst_96 = arith.constant -1.000000e+30 : f32
    %373 = vector.broadcast %cst_96 : f32 to vector<16x1xf32>
    %374 = vector.extract_strided_slice %368 {offsets = [0, 0], sizes = [16, 15], strides = [1, 1]} : vector<16x16xf32> to vector<16x15xf32>
    %375 = tpu.concatenate %373, %374 in 1 : vector<16x1xf32>, vector<16x15xf32> -> vector<16x16xf32>
    %376 = arith.maximumf %372, %375 : vector<16x16xf32>
    %377 = arith.subf %343, %376 : vector<16x16xf32>
    %cst_97 = arith.constant 0.000000e+00 : f32
    %378 = vector.broadcast %cst_97 : f32 to vector<16x16xf32>
    %379 = arith.maximumf %377, %378 : vector<16x16xf32>
    %380 = arith.mulf %326, %379 : vector<16x16xf32>
    %381 = arith.subf %379, %380 : vector<16x16xf32>
    %cst_98 = arith.constant 0.000000e+00 : f32
    %382 = vector.broadcast %cst_98 : f32 to vector<16x16xf32>
    %383 = arith.maximumf %381, %382 : vector<16x16xf32>
    %384 = arith.addf %326, %383 : vector<16x16xf32>
    %cst_99 = arith.constant 1.000000e+30 : f32
    %385 = vector.broadcast %cst_99 : f32 to vector<1x16xf32>
    %386 = vector.extract_strided_slice %343 {offsets = [1, 0], sizes = [15, 16], strides = [1, 1]} : vector<16x16xf32> to vector<15x16xf32>
    %387 = tpu.concatenate %386, %385 in 0 : vector<15x16xf32>, vector<1x16xf32> -> vector<16x16xf32>
    %388 = arith.minimumf %387, %343 : vector<16x16xf32>
    %cst_100 = arith.constant 1.000000e+30 : f32
    %389 = vector.broadcast %cst_100 : f32 to vector<1x16xf32>
    %390 = vector.extract_strided_slice %343 {offsets = [0, 0], sizes = [15, 16], strides = [1, 1]} : vector<16x16xf32> to vector<15x16xf32>
    %391 = tpu.concatenate %389, %390 in 0 : vector<1x16xf32>, vector<15x16xf32> -> vector<16x16xf32>
    %392 = arith.minimumf %388, %391 : vector<16x16xf32>
    %cst_101 = arith.constant 1.000000e+30 : f32
    %393 = vector.broadcast %cst_101 : f32 to vector<16x1xf32>
    %394 = vector.extract_strided_slice %343 {offsets = [0, 1], sizes = [16, 15], strides = [1, 1]} : vector<16x16xf32> to vector<16x15xf32>
    %395 = tpu.concatenate %394, %393 in 1 : vector<16x15xf32>, vector<16x1xf32> -> vector<16x16xf32>
    %396 = arith.minimumf %395, %343 : vector<16x16xf32>
    %cst_102 = arith.constant 1.000000e+30 : f32
    %397 = vector.broadcast %cst_102 : f32 to vector<16x1xf32>
    %398 = vector.extract_strided_slice %343 {offsets = [0, 0], sizes = [16, 15], strides = [1, 1]} : vector<16x16xf32> to vector<16x15xf32>
    %399 = tpu.concatenate %397, %398 in 1 : vector<16x1xf32>, vector<16x15xf32> -> vector<16x16xf32>
    %400 = arith.minimumf %396, %399 : vector<16x16xf32>
    %401 = arith.minimumf %392, %400 : vector<16x16xf32>
    %cst_103 = arith.constant 1.000000e+30 : f32
    %402 = vector.broadcast %cst_103 : f32 to vector<1x16xf32>
    %403 = vector.extract_strided_slice %401 {offsets = [1, 0], sizes = [15, 16], strides = [1, 1]} : vector<16x16xf32> to vector<15x16xf32>
    %404 = tpu.concatenate %403, %402 in 0 : vector<15x16xf32>, vector<1x16xf32> -> vector<16x16xf32>
    %405 = arith.minimumf %404, %401 : vector<16x16xf32>
    %cst_104 = arith.constant 1.000000e+30 : f32
    %406 = vector.broadcast %cst_104 : f32 to vector<1x16xf32>
    %407 = vector.extract_strided_slice %401 {offsets = [0, 0], sizes = [15, 16], strides = [1, 1]} : vector<16x16xf32> to vector<15x16xf32>
    %408 = tpu.concatenate %406, %407 in 0 : vector<1x16xf32>, vector<15x16xf32> -> vector<16x16xf32>
    %409 = arith.minimumf %405, %408 : vector<16x16xf32>
    %cst_105 = arith.constant 1.000000e+30 : f32
    %410 = vector.broadcast %cst_105 : f32 to vector<16x1xf32>
    %411 = vector.extract_strided_slice %401 {offsets = [0, 1], sizes = [16, 15], strides = [1, 1]} : vector<16x16xf32> to vector<16x15xf32>
    %412 = tpu.concatenate %411, %410 in 1 : vector<16x15xf32>, vector<16x1xf32> -> vector<16x16xf32>
    %413 = arith.minimumf %412, %401 : vector<16x16xf32>
    %cst_106 = arith.constant 1.000000e+30 : f32
    %414 = vector.broadcast %cst_106 : f32 to vector<16x1xf32>
    %415 = vector.extract_strided_slice %401 {offsets = [0, 0], sizes = [16, 15], strides = [1, 1]} : vector<16x16xf32> to vector<16x15xf32>
    %416 = tpu.concatenate %414, %415 in 1 : vector<16x1xf32>, vector<16x15xf32> -> vector<16x16xf32>
    %417 = arith.minimumf %413, %416 : vector<16x16xf32>
    %418 = arith.minimumf %409, %417 : vector<16x16xf32>
    %cst_107 = arith.constant -1.000000e+30 : f32
    %419 = vector.broadcast %cst_107 : f32 to vector<1x16xf32>
    %420 = vector.extract_strided_slice %418 {offsets = [1, 0], sizes = [15, 16], strides = [1, 1]} : vector<16x16xf32> to vector<15x16xf32>
    %421 = tpu.concatenate %420, %419 in 0 : vector<15x16xf32>, vector<1x16xf32> -> vector<16x16xf32>
    %422 = arith.maximumf %421, %418 : vector<16x16xf32>
    %cst_108 = arith.constant -1.000000e+30 : f32
    %423 = vector.broadcast %cst_108 : f32 to vector<1x16xf32>
    %424 = vector.extract_strided_slice %418 {offsets = [0, 0], sizes = [15, 16], strides = [1, 1]} : vector<16x16xf32> to vector<15x16xf32>
    %425 = tpu.concatenate %423, %424 in 0 : vector<1x16xf32>, vector<15x16xf32> -> vector<16x16xf32>
    %426 = arith.maximumf %422, %425 : vector<16x16xf32>
    %cst_109 = arith.constant -1.000000e+30 : f32
    %427 = vector.broadcast %cst_109 : f32 to vector<16x1xf32>
    %428 = vector.extract_strided_slice %426 {offsets = [0, 1], sizes = [16, 15], strides = [1, 1]} : vector<16x16xf32> to vector<16x15xf32>
    %429 = tpu.concatenate %428, %427 in 1 : vector<16x15xf32>, vector<16x1xf32> -> vector<16x16xf32>
    %430 = arith.maximumf %429, %426 : vector<16x16xf32>
    %cst_110 = arith.constant -1.000000e+30 : f32
    %431 = vector.broadcast %cst_110 : f32 to vector<16x1xf32>
    %432 = vector.extract_strided_slice %426 {offsets = [0, 0], sizes = [16, 15], strides = [1, 1]} : vector<16x16xf32> to vector<16x15xf32>
    %433 = tpu.concatenate %431, %432 in 1 : vector<16x1xf32>, vector<16x15xf32> -> vector<16x16xf32>
    %434 = arith.maximumf %430, %433 : vector<16x16xf32>
    %435 = arith.subf %401, %434 : vector<16x16xf32>
    %cst_111 = arith.constant 0.000000e+00 : f32
    %436 = vector.broadcast %cst_111 : f32 to vector<16x16xf32>
    %437 = arith.maximumf %435, %436 : vector<16x16xf32>
    %438 = arith.mulf %384, %437 : vector<16x16xf32>
    %439 = arith.subf %437, %438 : vector<16x16xf32>
    %cst_112 = arith.constant 0.000000e+00 : f32
    %440 = vector.broadcast %cst_112 : f32 to vector<16x16xf32>
    %441 = arith.maximumf %439, %440 : vector<16x16xf32>
    %442 = arith.addf %384, %441 : vector<16x16xf32>
    %443 = arith.mulf %14, %3 : vector<16x16xf32>
    %cst_113 = arith.constant dense<0.000000e+00> : vector<16xf32>
    %444 = vector.multi_reduction <add>, %443, %cst_113 [1] : vector<16x16xf32> to vector<16xf32>
    %445 = vector.shape_cast %444 : vector<16xf32> to vector<16x1xf32>
    %cst_114 = arith.constant dense<0.000000e+00> : vector<1xf32>
    %446 = vector.multi_reduction <add>, %445, %cst_114 [0] : vector<16x1xf32> to vector<1xf32>
    %447 = vector.shape_cast %446 : vector<1xf32> to vector<1x1xf32>
    %cst_115 = arith.constant dense<0.000000e+00> : vector<16xf32>
    %448 = vector.multi_reduction <add>, %14, %cst_115 [1] : vector<16x16xf32> to vector<16xf32>
    %449 = vector.shape_cast %448 : vector<16xf32> to vector<16x1xf32>
    %cst_116 = arith.constant dense<0.000000e+00> : vector<1xf32>
    %450 = vector.multi_reduction <add>, %449, %cst_116 [0] : vector<16x1xf32> to vector<1xf32>
    %451 = vector.shape_cast %450 : vector<1xf32> to vector<1x1xf32>
    %cst_117 = arith.constant dense<0.000000e+00> : vector<16xf32>
    %452 = vector.multi_reduction <add>, %3, %cst_117 [1] : vector<16x16xf32> to vector<16xf32>
    %453 = vector.shape_cast %452 : vector<16xf32> to vector<16x1xf32>
    %cst_118 = arith.constant dense<0.000000e+00> : vector<1xf32>
    %454 = vector.multi_reduction <add>, %453, %cst_118 [0] : vector<16x1xf32> to vector<1xf32>
    %455 = vector.shape_cast %454 : vector<1xf32> to vector<1x1xf32>
    %cst_119 = arith.constant dense<0.000000e+00> : vector<16xf32>
    %456 = vector.multi_reduction <add>, %22, %cst_119 [1] : vector<16x16xf32> to vector<16xf32>
    %457 = vector.shape_cast %456 : vector<16xf32> to vector<16x1xf32>
    %cst_120 = arith.constant dense<0.000000e+00> : vector<1xf32>
    %458 = vector.multi_reduction <add>, %457, %cst_120 [0] : vector<16x1xf32> to vector<1xf32>
    %459 = vector.shape_cast %458 : vector<1xf32> to vector<1x1xf32>
    %460 = arith.mulf %232, %3 : vector<16x16xf32>
    %cst_121 = arith.constant dense<0.000000e+00> : vector<16xf32>
    %461 = vector.multi_reduction <add>, %460, %cst_121 [1] : vector<16x16xf32> to vector<16xf32>
    %462 = vector.shape_cast %461 : vector<16xf32> to vector<16x1xf32>
    %cst_122 = arith.constant dense<0.000000e+00> : vector<1xf32>
    %463 = vector.multi_reduction <add>, %462, %cst_122 [0] : vector<16x1xf32> to vector<1xf32>
    %464 = vector.shape_cast %463 : vector<1xf32> to vector<1x1xf32>
    %cst_123 = arith.constant dense<0.000000e+00> : vector<16xf32>
    %465 = vector.multi_reduction <add>, %232, %cst_123 [1] : vector<16x16xf32> to vector<16xf32>
    %466 = vector.shape_cast %465 : vector<16xf32> to vector<16x1xf32>
    %cst_124 = arith.constant dense<0.000000e+00> : vector<1xf32>
    %467 = vector.multi_reduction <add>, %466, %cst_124 [0] : vector<16x1xf32> to vector<1xf32>
    %468 = vector.shape_cast %467 : vector<1xf32> to vector<1x1xf32>
    %469 = arith.mulf %442, %14 : vector<16x16xf32>
    %cst_125 = arith.constant dense<0.000000e+00> : vector<16xf32>
    %470 = vector.multi_reduction <add>, %469, %cst_125 [1] : vector<16x16xf32> to vector<16xf32>
    %471 = vector.shape_cast %470 : vector<16xf32> to vector<16x1xf32>
    %cst_126 = arith.constant dense<0.000000e+00> : vector<1xf32>
    %472 = vector.multi_reduction <add>, %471, %cst_126 [0] : vector<16x1xf32> to vector<1xf32>
    %473 = vector.shape_cast %472 : vector<1xf32> to vector<1x1xf32>
    %cst_127 = arith.constant dense<0.000000e+00> : vector<16xf32>
    %474 = vector.multi_reduction <add>, %442, %cst_127 [1] : vector<16x16xf32> to vector<16xf32>
    %475 = vector.shape_cast %474 : vector<16xf32> to vector<16x1xf32>
    %cst_128 = arith.constant dense<0.000000e+00> : vector<1xf32>
    %476 = vector.multi_reduction <add>, %475, %cst_128 [0] : vector<16x1xf32> to vector<1xf32>
    %477 = vector.shape_cast %476 : vector<1xf32> to vector<1x1xf32>
    %478 = tpu.concatenate %447, %451, %455, %459, %464, %468, %473, %477 in 1 : vector<1x1xf32>, vector<1x1xf32>, vector<1x1xf32>, vector<1x1xf32>, vector<1x1xf32>, vector<1x1xf32>, vector<1x1xf32>, vector<1x1xf32> -> vector<1x8xf32>
    %c0_129 = arith.constant 0 : index
    %479 = arith.index_cast %arg1 : i32 to index
    %c0_130 = arith.constant 0 : index
    %480 = vector.load %arg4[%c0_129, %479, %c0_130] : memref<1x4x8xf32, #tpu.memory_space<vmem>>, vector<1x1x8xf32>
    %481 = vector.shape_cast %480 : vector<1x1x8xf32> to vector<1x8xf32>
    %482 = vector.shape_cast %478 : vector<1x8xf32> to vector<1x1x8xf32>
    tpu.vector_store %arg4[%c0_129, %479, %c0_130], %482 {strides = array<i32>} : memref<1x4x8xf32, #tpu.memory_space<vmem>>, vector<1x1x8xf32>,
    return
  }
  func.func @transform_0(%arg0: i32, %arg1: i32) -> (i32, i32, i32, i32) {
    %c0_i32 = arith.constant 0 : i32
    %c0_i32_0 = arith.constant 0 : i32
    %c0_i32_1 = arith.constant 0 : i32
    return %arg0, %arg1, %c0_i32, %c0_i32_0 : i32, i32, i32, i32
  }
  func.func @transform_1(%arg0: i32, %arg1: i32) -> (i32, i32, i32, i32) {
    %c0_i32 = arith.constant 0 : i32
    %c0_i32_0 = arith.constant 0 : i32
    %c0_i32_1 = arith.constant 0 : i32
    return %arg0, %arg1, %c0_i32, %c0_i32_0 : i32, i32, i32, i32
  }
  func.func @transform_2(%arg0: i32, %arg1: i32) -> (i32, i32, i32) {
    %c0_i32 = arith.constant 0 : i32
    %c0_i32_0 = arith.constant 0 : i32
    %c0_i32_1 = arith.constant 0 : i32
    return %arg0, %c0_i32, %c0_i32_0 : i32, i32, i32
  }
}

</mosaic_0001>

<llo_original>
// kernel: cl_and_dc_and_bce_loss.1
$region0: #{cl_and_dc_and_bce_loss.1}
  #allocation0 [shape = 'u32[]', space=smem, size = 0x4, offset = 0x4, fixed_abs, tag = 'smem constant byte address 0x4 - core index']
  #allocation1 [shape = 'u32[144,128]{1,0:T(1,128)}', space=vmem, size = 0x12000, scoped, tag = 'internal scratch']
  %s0 = inlined_call_operand.hbm [shape: f32[2,4,16,16], index: 0, kind: input, shape index: {}]
  %s1 = inlined_call_operand.hbm [shape: f32[2,4,16,16], index: 1, kind: input, shape index: {}]
  %s2 = inlined_call_operand.vmem [shape: f32[2,4,8], index: 2, kind: output, shape index: {}]
  %s3 = sld [smem:[#allocation0]]
  $region49: #{cl_and_dc_and_bce_loss.1} parent=0
    _
  %s5 = ssub.s32 1, %s3
  %s6 = scalar_select 0, %s5, %s3
  $region1: #{cl_and_dc_and_bce_loss.1} parent=0
    #allocation2 [shape = 'u8[16384]{0}', space=vmem, size = 0x4000, scoped, tag = 'input window, operand 0']
    #allocation3 [shape = 's32[2]{0}', space=sflag, size = 0x8, scoped, tag = 'scoped memory for cl_and_dc_and_bce_loss.1']
    #allocation4 [shape = 'u8[16384]{0}', space=vmem, size = 0x4000, scoped, tag = 'input window, operand 1']
    #allocation5 [shape = 's32[2]{0}', space=sflag, size = 0x8, scoped, tag = 'scoped memory for cl_and_dc_and_bce_loss.1']
    %7 = vsyncpa [#allocation3], 0
    %s8 = scalar_lea.sflag [#allocation3], 1
    %9 = vsyncpa %s8, 0
    %10 = vsyncpa [#allocation5], 0
    %s11 = scalar_lea.sflag [#allocation5], 1
    %12 = vsyncpa %s11, 0
    loop: start=0, step=1, limit=10
    $region2: #{cl_and_dc_and_bce_loss.1} parent=1 // loop_pre_header
      _
    $region3: #{cl_and_dc_and_bce_loss.1} parent=1 // loop_header
      %s14 = sphi 0, %s18
      %p15 = scmp.ge.s32.totalorder %s14, 10
      %s21 = sphi 0, %s33
      %s22 = sphi 0, %s29
      %s23 = sphi 0, %s21
      %s24 = sphi 0, %s22
      %s25 = sphi 0, %s23
      %s26 = sphi 0, %s24
      %s38 = sphi 0, %s40
      %s41 = sphi 0, %s38
      %s42 = sphi 0, %s41
      %s58 = sphi 0, %s42
      %s66 = sphi 0, %s68
      %s69 = sphi 0, %s66
      %s70 = sphi 0, %s69
      %s86 = sphi 0, %s70
      %s92 = sphi 0, %s94
      %s95 = sphi 0, %s92
      %s96 = sphi 0, %s95
      %s112 = sphi 0, %s96
    $region4: #{cl_and_dc_and_bce_loss.1} parent=1 // loop_header_branch
      %17 = sbr.rel (%p15) target = $region8
    $region5: #{cl_and_dc_and_bce_loss.1} parent=1 // loop_body
      %s19 = ssub.s32 %s14, 1
      %s20 = ssub.s32 %s14, 2
      %s27 = sadd.s32 1, %s22
      %p28 = scmp.ge.s32.totalorder %s27, 4
      %s29 = scalar_select %p28, 0, %s27
      %s30 = sadd.s32 1, %s21
      %s31 = scalar_select %p28, %s30, %s21
      %p32 = scmp.ge.s32.totalorder %s31, 2
      %s33 = scalar_select %p32, 0, %s31
      %s34 = ssub.s32 %s21, %s33
      %s35 = ssub.s32 %s22, %s29
      %s36 = sor.u32 %s34, %s35
      %p37 = scmp.eq.s32.totalorder %s36, 0
      %s39 = sadd.s32 %s38, 1
      %s40 = scalar_select %p37, %s38, %s39
      %p43 = pneg %p37
      %p44 = scmp.eq.s32.totalorder %s14, 7
      %p45 = por %p43, %p44
      %p46 = scmp.ne.s32.totalorder %s38, %s41
      %p47 = scmp.eq.s32.totalorder %s14, 0
      %p48 = por %p46, %p47
      %p49 = scmp.ne.s32.totalorder %s38, %s41
      %p50 = scmp.eq.s32.totalorder %s19, 7
      %p51 = por %p49, %p50
      %p52 = scmp.ne.s32.totalorder %s41, %s42
      %p53 = scmp.eq.s32.totalorder %s19, 0
      %p54 = por %p52, %p53
      %p55 = scmp.ne.s32.totalorder %s41, %s42
      %p56 = scmp.eq.s32.totalorder %s20, 7
      %p57 = por %p55, %p56
      %p59 = scmp.ne.s32.totalorder %s42, %s58
      %p60 = scmp.eq.s32.totalorder %s20, 0
      %p61 = por %p59, %p60
      %s62 = ssub.s32 %s21, %s33
      %s63 = ssub.s32 %s22, %s29
      %s64 = sor.u32 %s62, %s63
      %p65 = scmp.eq.s32.totalorder %s64, 0
      %s67 = sadd.s32 %s66, 1
      %s68 = scalar_select %p65, %s66, %s67
      %p71 = pneg %p65
      %p72 = scmp.eq.s32.totalorder %s14, 7
      %p73 = por %p71, %p72
      %p74 = scmp.ne.s32.totalorder %s66, %s69
      %p75 = scmp.eq.s32.totalorder %s14, 0
      %p76 = por %p74, %p75
      %p77 = scmp.ne.s32.totalorder %s66, %s69
      %p78 = scmp.eq.s32.totalorder %s19, 7
      %p79 = por %p77, %p78
      %p80 = scmp.ne.s32.totalorder %s69, %s70
      %p81 = scmp.eq.s32.totalorder %s19, 0
      %p82 = por %p80, %p81
      %p83 = scmp.ne.s32.totalorder %s69, %s70
      %p84 = scmp.eq.s32.totalorder %s20, 7
      %p85 = por %p83, %p84
      %p87 = scmp.ne.s32.totalorder %s70, %s86
      %p88 = scmp.eq.s32.totalorder %s20, 0
      %p89 = por %p87, %p88
      %s90 = ssub.s32 %s21, %s33
      %p91 = scmp.eq.s32.totalorder %s90, 0
      %s93 = sadd.s32 %s92, 1
      %s94 = scalar_select %p91, %s92, %s93
      %p97 = pneg %p91
      %p98 = scmp.eq.s32.totalorder %s14, 7
      %p99 = por %p97, %p98
      %p100 = scmp.ne.s32.totalorder %s92, %s95
      %p101 = scmp.eq.s32.totalorder %s14, 0
      %p102 = por %p100, %p101
      %p103 = scmp.ne.s32.totalorder %s92, %s95
      %p104 = scmp.eq.s32.totalorder %s19, 7
      %p105 = por %p103, %p104
      %p106 = scmp.ne.s32.totalorder %s95, %s96
      %p107 = scmp.eq.s32.totalorder %s19, 0
      %p108 = por %p106, %p107
      %p109 = scmp.ne.s32.totalorder %s95, %s96
      %p110 = scmp.eq.s32.totalorder %s20, 7
      %p111 = por %p109, %p110
      %p113 = scmp.ne.s32.totalorder %s96, %s112
      %p114 = scmp.eq.s32.totalorder %s20, 0
      %p115 = por %p113, %p114
      %p116 = scmp.le.s32.totalorder 1, %s14
      %p117 = scmp.lt.s32.totalorder %s14, 9
      %p118 = pnand %p116, %p117
      %p119 = pneg %p118
      // Predicated region
      $region9: #{cl_and_dc_and_bce_loss.1} parent=5 // pred_check
        _
      $region10: #{cl_and_dc_and_bce_loss.1} parent=5 // pred_check_branch
        %121 = sbr.rel (%p118) target = $region12
      $region11: #{cl_and_dc_and_bce_loss.1} parent=5 // pred_region
        %s122 = ssub.s32 %s14, 1
      $region12: #{cl_and_dc_and_bce_loss.1} parent=5 // pred_fallthru
        _
      %p123 = scmp.lt.s32.totalorder %s14, 8
      // Predicated region
      $region13: #{cl_and_dc_and_bce_loss.1} parent=5 // pred_check
        %p124 = pneg %p123
      $region14: #{cl_and_dc_and_bce_loss.1} parent=5 // pred_check_branch
        %126 = sbr.rel (%p124) target = $region16
      $region15: #{cl_and_dc_and_bce_loss.1} parent=5 // pred_region
        // Predicated region
        $region17: #{cl_and_dc_and_bce_loss.1} parent=15 // pred_check
          %p127 = pneg %p48
        $region18: #{cl_and_dc_and_bce_loss.1} parent=15 // pred_check_branch
          %129 = sbr.rel (%p127) target = $region20
        $region19: #{cl_and_dc_and_bce_loss.1} parent=15 // pred_region
          %s130 = sand.u32 %s38, 1
          %s131 = scalar_lea.sflag [#allocation3], %s130
          %s132 = sand.u32 %s38, 1
          %s133 = smul.addr %s132, 16
          %s134 = scalar_lea.vmem [#allocation2], %s133
          %s136 = ssub.s32 256, 256
          %137 = vsyncadd %s131, %s136
          %s138 = smul.addr %s22, 2
          %s139 = smul.addr %s21, 8
          %s140 = sadd.s32 %s138, %s139
          %s141 = smul.addr %s140, 128
          %s142 = scalar_lea.hbm %s0, %s141
          %s143 = sshll.u32 %s134, 4
          %s144 = int_to_ptr.vmem [resolvable:$true] %s143
          %149 = dma.hbm_to_vmem [thread:$0]  %s142, 256, %s144, %s131, 128, 128, 8
        $region20: #{cl_and_dc_and_bce_loss.1} parent=15 // pred_fallthru
          _
        // Predicated region
        $region21: #{cl_and_dc_and_bce_loss.1} parent=15 // pred_check
          %p150 = pneg %p76
        $region22: #{cl_and_dc_and_bce_loss.1} parent=15 // pred_check_branch
          %152 = sbr.rel (%p150) target = $region24
        $region23: #{cl_and_dc_and_bce_loss.1} parent=15 // pred_region
          %s153 = sand.u32 %s66, 1
          %s154 = scalar_lea.sflag [#allocation5], %s153
          %s155 = sand.u32 %s66, 1
          %s156 = smul.addr %s155, 16
          %s157 = scalar_lea.vmem [#allocation4], %s156
          %s159 = ssub.s32 256, 256
          %160 = vsyncadd %s154, %s159
          %s161 = smul.addr %s22, 2
          %s162 = smul.addr %s21, 8
          %s163 = sadd.s32 %s161, %s162
          %s164 = smul.addr %s163, 128
          %s165 = scalar_lea.hbm %s1, %s164
          %s166 = sshll.u32 %s157, 4
          %s167 = int_to_ptr.vmem [resolvable:$true] %s166
          %172 = dma.hbm_to_vmem [thread:$0]  %s165, 256, %s167, %s154, 128, 128, 8
        $region24: #{cl_and_dc_and_bce_loss.1} parent=15 // pred_fallthru
          _
      $region16: #{cl_and_dc_and_bce_loss.1} parent=5 // pred_fallthru
        _
      %p173 = scmp.le.s32.totalorder 1, %s14
      %p174 = scmp.lt.s32.totalorder %s14, 9
      %p175 = pnand %p173, %p174
      %p176 = pneg %p175
      // Predicated region
      $region25: #{cl_and_dc_and_bce_loss.1} parent=5 // pred_check
        _
      $region26: #{cl_and_dc_and_bce_loss.1} parent=5 // pred_check_branch
        %178 = sbr.rel (%p175) target = $region28
      $region27: #{cl_and_dc_and_bce_loss.1} parent=5 // pred_region
        %s179 = ssub.s32 %s14, 1
        %s180 = sand.u32 %s41, 1
        %s181 = scalar_lea.sflag [#allocation3], %s180
        %s182 = sand.u32 %s41, 1
        %s183 = smul.addr %s182, 16
        %s184 = scalar_lea.vmem [#allocation2], %s183
        // Predicated region
        $region29: #{cl_and_dc_and_bce_loss.1} parent=27 // pred_check
          %p185 = pneg %p54
        $region30: #{cl_and_dc_and_bce_loss.1} parent=27 // pred_check_branch
          %187 = sbr.rel (%p185) target = $region32
        $region31: #{cl_and_dc_and_bce_loss.1} parent=27 // pred_region
          %188 = dma.done %s181, 256
        $region32: #{cl_and_dc_and_bce_loss.1} parent=27 // pred_fallthru
          _
        %s189 = sand.u32 %s69, 1
        %s190 = scalar_lea.sflag [#allocation5], %s189
        %s191 = sand.u32 %s69, 1
        %s192 = smul.addr %s191, 16
        %s193 = scalar_lea.vmem [#allocation4], %s192
        // Predicated region
        $region33: #{cl_and_dc_and_bce_loss.1} parent=27 // pred_check
          %p194 = pneg %p82
        $region34: #{cl_and_dc_and_bce_loss.1} parent=27 // pred_check_branch
          %196 = sbr.rel (%p194) target = $region36
        $region35: #{cl_and_dc_and_bce_loss.1} parent=27 // pred_region
          %197 = dma.done %s190, 256
        $region36: #{cl_and_dc_and_bce_loss.1} parent=27 // pred_fallthru
          _
        %s198 = sand.u32 %s41, 1
        %s199 = scalar_lea.sflag [#allocation3], %s198
        %s200 = sand.u32 %s41, 1
        %s201 = smul.addr %s200, 16
        %s202 = scalar_lea.vmem [#allocation2], %s201
        %p203 = pneg %p54
        %p204 = pneg %p51
        %s205 = sand.u32 %s69, 1
        %s206 = scalar_lea.sflag [#allocation5], %s205
        %s207 = sand.u32 %s69, 1
        %s208 = smul.addr %s207, 16
        %s209 = scalar_lea.vmem [#allocation4], %s208
        %p210 = pneg %p82
        %p211 = pneg %p79
        %p212 = pneg %p108
        %p213 = pneg %p105
        %p214 = scmp.lt.s32.totalorder %s23, 1
        %s215 = scalar_select %p214, %s23, 1
        %s216 = smul.addr %s215, 4
        %s217 = scalar_lea.vmem %s2, %s216
        %p218 = scmp.lt.s32.totalorder %s23, 1
        %s219 = scalar_select %p218, %s23, 1
        %s220 = smul.addr %s219, 4
        %s221 = scalar_lea.vmem %s2, %s220
        %v222 = vld [vmem:[%s184] sm:$0xff]
        %v223 = vld [vmem:[%s184 + $0x8] sm:$0xff]
        %v224 = vld [vmem:[%s193] sm:$0xff]
        %v225 = vld [vmem:[%s193 + $0x8] sm:$0xff]
        %v226 = vand.u32 2147483647, %v222
        %v227 = vand.u32 2147483647, %v223
        %v228 = vsub.f32 0.0, %v226
        %v229 = vsub.f32 0.0, %v227
        %v230 = vmul.f32 %v228, 1.442695
        %v231 = vpow.pop %v230
        %v232 = vmul.f32 %v229, 1.442695
        %v233 = vpow.pop %v232
        %v234 = vadd.f32 %v231, 1.0
        %v235 = vadd.f32 %v233, 1.0
        %v236 = vrcp.pop %v234
        %v237 = vrcp.pop %v235
        %vm238 = vcmp.ge.f32.partialorder %v222, 0.0
        %vm239 = vcmp.ge.f32.partialorder %v223, 0.0
        %v240 = vmul.f32 %v231, %v236
        %v241 = vmul.f32 %v233, %v237
        %v242 = vsel %vm238, %v236, %v240
        %v243 = vsel %vm239, %v237, %v241
        %v244 = vmax.f32 %v222, 0.0
        %v245 = vmax.f32 %v223, 0.0
        %v246 = vmul.f32 %v222, %v224
        %v247 = vmul.f32 %v223, %v225
        %v248 = vsub.f32 %v244, %v246
        %v249 = vsub.f32 %v245, %v247
        %v250 = vlog2.pop %v234
        %v251 = vmul.f32 %v250, 0.6931472
        %v252 = vlog2.pop %v235
        %v253 = vmul.f32 %v252, 0.6931472
        %v254 = vadd.f32 %v248, %v251
        %v255 = vadd.f32 %v249, %v253
        %vm258 = vcmask 1046528
        %v259 = vrot.slane %v242, 1
        %v260 = vrot.slane %v243, 1
        %v261 = vsel %vm258, %v259, %v260
        %v264 = vsel %vm258, %v260, 1e+30
        %v265 = vmin.f32 %v261, %v242
        %v266 = vmin.f32 %v264, %v243
        %vm267 = vcmask 1040384
        %v268 = vrot.slane %v242, 7
        %v269 = vrot.slane %v243, 7
        %v270 = vsel %vm267, %v268, %v269
        %v273 = vsel %vm267, 1e+30, %v268
        %v274 = vmin.f32 %v265, %v273
        %v275 = vmin.f32 %v266, %v270
        %276 = vrot.lane.b32.xlu0 %v242, 127
        %v277 = vpop.permute.xlu0 %276
        %278 = vrot.lane.b32.xlu0 %v243, 127
        %v279 = vpop.permute.xlu0 %278
        %vm282 = vcmask 121856
        %v283 = vsel %vm282, %v277, 1e+30
        %v284 = vsel %vm282, %v279, 1e+30
        %v285 = vmin.f32 %v283, %v242
        %v286 = vmin.f32 %v284, %v243
        %287 = vrot.lane.b32.xlu0 %v242, 1
        %v288 = vpop.permute.xlu0 %287
        %289 = vrot.lane.b32.xlu0 %v243, 1
        %v290 = vpop.permute.xlu0 %289
        %vm293 = vcmask 7168
        %v294 = vsel %vm293, 1e+30, %v288
        %v295 = vsel %vm293, 1e+30, %v290
        %v296 = vmin.f32 %v285, %v294
        %v297 = vmin.f32 %v286, %v295
        %v298 = vmin.f32 %v274, %v296
        %v299 = vmin.f32 %v275, %v297
        %v302 = vrot.slane %v298, 1
        %v303 = vrot.slane %v299, 1
        %v304 = vsel %vm258, %v302, %v303
        %v307 = vsel %vm258, %v303, -1e+30
        %v308 = vmax.f32 %v304, %v298
        %v309 = vmax.f32 %v307, %v299
        %v310 = vrot.slane %v298, 7
        %v311 = vrot.slane %v299, 7
        %v312 = vsel %vm267, %v310, %v311
        %v315 = vsel %vm267, -1e+30, %v310
        %v316 = vmax.f32 %v308, %v315
        %v317 = vmax.f32 %v309, %v312
        %320 = vrot.lane.b32.xlu0 %v316, 127
        %v321 = vpop.permute.xlu0 %320
        %322 = vrot.lane.b32.xlu0 %v317, 127
        %v323 = vpop.permute.xlu0 %322
        %v326 = vsel %vm282, %v321, -1e+30
        %v327 = vsel %vm282, %v323, -1e+30
        %v328 = vmax.f32 %v326, %v316
        %v329 = vmax.f32 %v327, %v317
        %330 = vrot.lane.b32.xlu0 %v316, 1
        %v331 = vpop.permute.xlu0 %330
        %332 = vrot.lane.b32.xlu0 %v317, 1
        %v333 = vpop.permute.xlu0 %332
        %v336 = vsel %vm293, -1e+30, %v331
        %v337 = vsel %vm293, -1e+30, %v333
        %v338 = vmax.f32 %v328, %v336
        %v339 = vmax.f32 %v329, %v337
        %v340 = vsub.f32 %v242, %v338
        %v341 = vsub.f32 %v243, %v339
        %v342 = vmax.f32 %v340, 0.0
        %v343 = vmax.f32 %v341, 0.0
        %v344 = vsel %vm258, %v303, 1e+30
        %v345 = vmin.f32 %v304, %v298
        %v346 = vmin.f32 %v344, %v299
        %v347 = vsel %vm267, 1e+30, %v310
        %v348 = vmin.f32 %v345, %v347
        %v349 = vmin.f32 %v346, %v312
        %350 = vrot.lane.b32.xlu0 %v298, 127
        %v351 = vpop.permute.xlu0 %350
        %352 = vrot.lane.b32.xlu0 %v299, 127
        %v353 = vpop.permute.xlu0 %352
        %v356 = vsel %vm282, %v351, 1e+30
        %v357 = vsel %vm282, %v353, 1e+30
        %v358 = vmin.f32 %v356, %v298
        %v359 = vmin.f32 %v357, %v299
        %360 = vrot.lane.b32.xlu0 %v298, 1
        %v361 = vpop.permute.xlu0 %360
        %362 = vrot.lane.b32.xlu0 %v299, 1
        %v363 = vpop.permute.xlu0 %362
        %v366 = vsel %vm293, 1e+30, %v361
        %v367 = vsel %vm293, 1e+30, %v363
        %v368 = vmin.f32 %v358, %v366
        %v369 = vmin.f32 %v359, %v367
        %v370 = vmin.f32 %v348, %v368
        %v371 = vmin.f32 %v349, %v369
        %v374 = vrot.slane %v370, 1
        %v375 = vrot.slane %v371, 1
        %v376 = vsel %vm258, %v374, %v375
        %v379 = vsel %vm258, %v375, -1e+30
        %v380 = vmax.f32 %v376, %v370
        %v381 = vmax.f32 %v379, %v371
        %v382 = vrot.slane %v370, 7
        %v383 = vrot.slane %v371, 7
        %v384 = vsel %vm267, %v382, %v383
        %v387 = vsel %vm267, -1e+30, %v382
        %v388 = vmax.f32 %v380, %v387
        %v389 = vmax.f32 %v381, %v384
        %392 = vrot.lane.b32.xlu0 %v388, 127
        %v393 = vpop.permute.xlu0 %392
        %394 = vrot.lane.b32.xlu0 %v389, 127
        %v395 = vpop.permute.xlu0 %394
        %v398 = vsel %vm282, %v393, -1e+30
        %v399 = vsel %vm282, %v395, -1e+30
        %v400 = vmax.f32 %v398, %v388
        %v401 = vmax.f32 %v399, %v389
        %402 = vrot.lane.b32.xlu0 %v388, 1
        %v403 = vpop.permute.xlu0 %402
        %404 = vrot.lane.b32.xlu0 %v389, 1
        %v405 = vpop.permute.xlu0 %404
        %v408 = vsel %vm293, -1e+30, %v403
        %v409 = vsel %vm293, -1e+30, %v405
        %v410 = vmax.f32 %v400, %v408
        %v411 = vmax.f32 %v401, %v409
        %v412 = vsub.f32 %v298, %v410
        %v413 = vsub.f32 %v299, %v411
        %v414 = vmax.f32 %v412, 0.0
        %v415 = vmax.f32 %v413, 0.0
        %v416 = vmul.f32 %v342, %v414
        %v417 = vmul.f32 %v343, %v415
        %v418 = vsub.f32 %v414, %v416
        %v419 = vsub.f32 %v415, %v417
        %v420 = vmax.f32 %v418, 0.0
        %v421 = vmax.f32 %v419, 0.0
        %v422 = vadd.f32 %v342, %v420
        %v423 = vadd.f32 %v343, %v421
        %v424 = vsel %vm258, %v375, 1e+30
        %v425 = vmin.f32 %v376, %v370
        %v426 = vmin.f32 %v424, %v371
        %v427 = vsel %vm267, 1e+30, %v382
        %v428 = vmin.f32 %v425, %v427
        %v429 = vmin.f32 %v426, %v384
        %430 = vrot.lane.b32.xlu0 %v370, 127
        %v431 = vpop.permute.xlu0 %430
        %432 = vrot.lane.b32.xlu0 %v371, 127
        %v433 = vpop.permute.xlu0 %432
        %v436 = vsel %vm282, %v431, 1e+30
        %v437 = vsel %vm282, %v433, 1e+30
        %v438 = vmin.f32 %v436, %v370
        %v439 = vmin.f32 %v437, %v371
        %440 = vrot.lane.b32.xlu0 %v370, 1
        %v441 = vpop.permute.xlu0 %440
        %442 = vrot.lane.b32.xlu0 %v371, 1
        %v443 = vpop.permute.xlu0 %442
        %v446 = vsel %vm293, 1e+30, %v441
        %v447 = vsel %vm293, 1e+30, %v443
        %v448 = vmin.f32 %v438, %v446
        %v449 = vmin.f32 %v439, %v447
        %v450 = vmin.f32 %v428, %v448
        %v451 = vmin.f32 %v429, %v449
        %v454 = vrot.slane %v450, 1
        %v455 = vrot.slane %v451, 1
        %v456 = vsel %vm258, %v454, %v455
        %v459 = vsel %vm258, %v455, -1e+30
        %v460 = vmax.f32 %v456, %v450
        %v461 = vmax.f32 %v459, %v451
        %v462 = vrot.slane %v450, 7
        %v463 = vrot.slane %v451, 7
        %v464 = vsel %vm267, %v462, %v463
        %v467 = vsel %vm267, -1e+30, %v462
        %v468 = vmax.f32 %v460, %v467
        %v469 = vmax.f32 %v461, %v464
        %472 = vrot.lane.b32.xlu0 %v468, 127
        %v473 = vpop.permute.xlu0 %472
        %474 = vrot.lane.b32.xlu0 %v469, 127
        %v475 = vpop.permute.xlu0 %474
        %v478 = vsel %vm282, %v473, -1e+30
        %v479 = vsel %vm282, %v475, -1e+30
        %v480 = vmax.f32 %v478, %v468
        %v481 = vmax.f32 %v479, %v469
        %482 = vrot.lane.b32.xlu0 %v468, 1
        %v483 = vpop.permute.xlu0 %482
        %484 = vrot.lane.b32.xlu0 %v469, 1
        %v485 = vpop.permute.xlu0 %484
        %v488 = vsel %vm293, -1e+30, %v483
        %v489 = vsel %vm293, -1e+30, %v485
        %v490 = vmax.f32 %v480, %v488
        %v491 = vmax.f32 %v481, %v489
        %v492 = vsub.f32 %v370, %v490
        %v493 = vsub.f32 %v371, %v491
        %v494 = vmax.f32 %v492, 0.0
        %v495 = vmax.f32 %v493, 0.0
        %v496 = vmul.f32 %v422, %v494
        %v497 = vmul.f32 %v423, %v495
        %v498 = vsub.f32 %v494, %v496
        %v499 = vsub.f32 %v495, %v497
        %v500 = vmax.f32 %v498, 0.0
        %v501 = vmax.f32 %v499, 0.0
        %v502 = vadd.f32 %v422, %v500
        %v503 = vadd.f32 %v423, %v501
        %v504 = vsel %vm258, %v455, 1e+30
        %v505 = vmin.f32 %v456, %v450
        %v506 = vmin.f32 %v504, %v451
        %v507 = vsel %vm267, 1e+30, %v462
        %v508 = vmin.f32 %v505, %v507
        %v509 = vmin.f32 %v506, %v464
        %510 = vrot.lane.b32.xlu0 %v450, 127
        %v511 = vpop.permute.xlu0 %510
        %512 = vrot.lane.b32.xlu0 %v451, 127
        %v513 = vpop.permute.xlu0 %512
        %v516 = vsel %vm282, %v511, 1e+30
        %v517 = vsel %vm282, %v513, 1e+30
        %v518 = vmin.f32 %v516, %v450
        %v519 = vmin.f32 %v517, %v451
        %520 = vrot.lane.b32.xlu0 %v450, 1
        %v521 = vpop.permute.xlu0 %520
        %522 = vrot.lane.b32.xlu0 %v451, 1
        %v523 = vpop.permute.xlu0 %522
        %v526 = vsel %vm293, 1e+30, %v521
        %v527 = vsel %vm293, 1e+30, %v523
        %v528 = vmin.f32 %v518, %v526
        %v529 = vmin.f32 %v519, %v527
        %v530 = vmin.f32 %v508, %v528
        %v531 = vmin.f32 %v509, %v529
        %v534 = vrot.slane %v530, 1
        %v535 = vrot.slane %v531, 1
        %v536 = vsel %vm258, %v534, %v535
        %v539 = vsel %vm258, %v535, -1e+30
        %v540 = vmax.f32 %v536, %v530
        %v541 = vmax.f32 %v539, %v531
        %v542 = vrot.slane %v530, 7
        %v543 = vrot.slane %v531, 7
        %v544 = vsel %vm267, %v542, %v543
        %v547 = vsel %vm267, -1e+30, %v542
        %v548 = vmax.f32 %v540, %v547
        %v549 = vmax.f32 %v541, %v544
        %552 = vrot.lane.b32.xlu0 %v548, 127
        %v553 = vpop.permute.xlu0 %552
        %554 = vrot.lane.b32.xlu0 %v549, 127
        %v555 = vpop.permute.xlu0 %554
        %v558 = vsel %vm282, %v553, -1e+30
        %v559 = vsel %vm282, %v555, -1e+30
        %v560 = vmax.f32 %v558, %v548
        %v561 = vmax.f32 %v559, %v549
        %562 = vrot.lane.b32.xlu0 %v548, 1
        %v563 = vpop.permute.xlu0 %562
        %564 = vrot.lane.b32.xlu0 %v549, 1
        %v565 = vpop.permute.xlu0 %564
        %v568 = vsel %vm293, -1e+30, %v563
        %v569 = vsel %vm293, -1e+30, %v565
        %v570 = vmax.f32 %v560, %v568
        %v571 = vmax.f32 %v561, %v569
        %v572 = vsub.f32 %v450, %v570
        %v573 = vsub.f32 %v451, %v571
        %v574 = vmax.f32 %v572, 0.0
        %v575 = vmax.f32 %v573, 0.0
        %v576 = vmul.f32 %v502, %v574
        %v577 = vmul.f32 %v503, %v575
        %v578 = vsub.f32 %v574, %v576
        %v579 = vsub.f32 %v575, %v577
        %v580 = vmax.f32 %v578, 0.0
        %v581 = vmax.f32 %v579, 0.0
        %v582 = vadd.f32 %v502, %v580
        %v583 = vadd.f32 %v503, %v581
        %v586 = vrot.slane %v224, 1
        %v587 = vrot.slane %v225, 1
        %v588 = vsel %vm258, %v586, %v587
        %v591 = vsel %vm258, %v587, 1e+30
        %v592 = vmin.f32 %v588, %v224
        %v593 = vmin.f32 %v591, %v225
        %v594 = vrot.slane %v224, 7
        %v595 = vrot.slane %v225, 7
        %v596 = vsel %vm267, %v594, %v595
        %v599 = vsel %vm267, 1e+30, %v594
        %v600 = vmin.f32 %v592, %v599
        %v601 = vmin.f32 %v593, %v596
        %602 = vrot.lane.b32.xlu0 %v224, 127
        %v603 = vpop.permute.xlu0 %602
        %604 = vrot.lane.b32.xlu0 %v225, 127
        %v605 = vpop.permute.xlu0 %604
        %v608 = vsel %vm282, %v603, 1e+30
        %v609 = vsel %vm282, %v605, 1e+30
        %v610 = vmin.f32 %v608, %v224
        %v611 = vmin.f32 %v609, %v225
        %612 = vrot.lane.b32.xlu0 %v224, 1
        %v613 = vpop.permute.xlu0 %612
        %614 = vrot.lane.b32.xlu0 %v225, 1
        %v615 = vpop.permute.xlu0 %614
        %v618 = vsel %vm293, 1e+30, %v613
        %v619 = vsel %vm293, 1e+30, %v615
        %v620 = vmin.f32 %v610, %v618
        %v621 = vmin.f32 %v611, %v619
        %v622 = vmin.f32 %v600, %v620
        %v623 = vmin.f32 %v601, %v621
        %v626 = vrot.slane %v622, 1
        %v627 = vrot.slane %v623, 1
        %v628 = vsel %vm258, %v626, %v627
        %v631 = vsel %vm258, %v627, -1e+30
        %v632 = vmax.f32 %v628, %v622
        %v633 = vmax.f32 %v631, %v623
        %v634 = vrot.slane %v622, 7
        %v635 = vrot.slane %v623, 7
        %v636 = vsel %vm267, %v634, %v635
        %v639 = vsel %vm267, -1e+30, %v634
        %v640 = vmax.f32 %v632, %v639
        %v641 = vmax.f32 %v633, %v636
        %644 = vrot.lane.b32.xlu0 %v640, 127
        %v645 = vpop.permute.xlu0 %644
        %646 = vrot.lane.b32.xlu0 %v641, 127
        %v647 = vpop.permute.xlu0 %646
        %v650 = vsel %vm282, %v645, -1e+30
        %v651 = vsel %vm282, %v647, -1e+30
        %v652 = vmax.f32 %v650, %v640
        %v653 = vmax.f32 %v651, %v641
        %654 = vrot.lane.b32.xlu0 %v640, 1
        %v655 = vpop.permute.xlu0 %654
        %656 = vrot.lane.b32.xlu0 %v641, 1
        %v657 = vpop.permute.xlu0 %656
        %v660 = vsel %vm293, -1e+30, %v655
        %v661 = vsel %vm293, -1e+30, %v657
        %v662 = vmax.f32 %v652, %v660
        %v663 = vmax.f32 %v653, %v661
        %v664 = vsub.f32 %v224, %v662
        %v665 = vsub.f32 %v225, %v663
        %v666 = vmax.f32 %v664, 0.0
        %v667 = vmax.f32 %v665, 0.0
        %v668 = vsel %vm258, %v627, 1e+30
        %v669 = vmin.f32 %v628, %v622
        %v670 = vmin.f32 %v668, %v623
        %v671 = vsel %vm267, 1e+30, %v634
        %v672 = vmin.f32 %v669, %v671
        %v673 = vmin.f32 %v670, %v636
        %674 = vrot.lane.b32.xlu0 %v622, 127
        %v675 = vpop.permute.xlu0 %674
        %676 = vrot.lane.b32.xlu0 %v623, 127
        %v677 = vpop.permute.xlu0 %676
        %v680 = vsel %vm282, %v675, 1e+30
        %v681 = vsel %vm282, %v677, 1e+30
        %v682 = vmin.f32 %v680, %v622
        %v683 = vmin.f32 %v681, %v623
        %684 = vrot.lane.b32.xlu0 %v622, 1
        %v685 = vpop.permute.xlu0 %684
        %686 = vrot.lane.b32.xlu0 %v623, 1
        %v687 = vpop.permute.xlu0 %686
        %v690 = vsel %vm293, 1e+30, %v685
        %v691 = vsel %vm293, 1e+30, %v687
        %v692 = vmin.f32 %v682, %v690
        %v693 = vmin.f32 %v683, %v691
        %v694 = vmin.f32 %v672, %v692
        %v695 = vmin.f32 %v673, %v693
        %v698 = vrot.slane %v694, 1
        %v699 = vrot.slane %v695, 1
        %v700 = vsel %vm258, %v698, %v699
        %v703 = vsel %vm258, %v699, -1e+30
        %v704 = vmax.f32 %v700, %v694
        %v705 = vmax.f32 %v703, %v695
        %v706 = vrot.slane %v694, 7
        %v707 = vrot.slane %v695, 7
        %v708 = vsel %vm267, %v706, %v707
        %v711 = vsel %vm267, -1e+30, %v706
        %v712 = vmax.f32 %v704, %v711
        %v713 = vmax.f32 %v705, %v708
        %716 = vrot.lane.b32.xlu0 %v712, 127
        %v717 = vpop.permute.xlu0 %716
        %718 = vrot.lane.b32.xlu0 %v713, 127
        %v719 = vpop.permute.xlu0 %718
        %v722 = vsel %vm282, %v717, -1e+30
        %v723 = vsel %vm282, %v719, -1e+30
        %v724 = vmax.f32 %v722, %v712
        %v725 = vmax.f32 %v723, %v713
        %726 = vrot.lane.b32.xlu0 %v712, 1
        %v727 = vpop.permute.xlu0 %726
        %728 = vrot.lane.b32.xlu0 %v713, 1
        %v729 = vpop.permute.xlu0 %728
        %v732 = vsel %vm293, -1e+30, %v727
        %v733 = vsel %vm293, -1e+30, %v729
        %v734 = vmax.f32 %v724, %v732
        %v735 = vmax.f32 %v725, %v733
        %v736 = vsub.f32 %v622, %v734
        %v737 = vsub.f32 %v623, %v735
        %v738 = vmax.f32 %v736, 0.0
        %v739 = vmax.f32 %v737, 0.0
        %v740 = vmul.f32 %v666, %v738
        %v741 = vmul.f32 %v667, %v739
        %v742 = vsub.f32 %v738, %v740
        %v743 = vsub.f32 %v739, %v741
        %v744 = vmax.f32 %v742, 0.0
        %v745 = vmax.f32 %v743, 0.0
        %v746 = vadd.f32 %v666, %v744
        %v747 = vadd.f32 %v667, %v745
        %v748 = vsel %vm258, %v699, 1e+30
        %v749 = vmin.f32 %v700, %v694
        %v750 = vmin.f32 %v748, %v695
        %v751 = vsel %vm267, 1e+30, %v706
        %v752 = vmin.f32 %v749, %v751
        %v753 = vmin.f32 %v750, %v708
        %754 = vrot.lane.b32.xlu0 %v694, 127
        %v755 = vpop.permute.xlu0 %754
        %756 = vrot.lane.b32.xlu0 %v695, 127
        %v757 = vpop.permute.xlu0 %756
        %v760 = vsel %vm282, %v755, 1e+30
        %v761 = vsel %vm282, %v757, 1e+30
        %v762 = vmin.f32 %v760, %v694
        %v763 = vmin.f32 %v761, %v695
        %764 = vrot.lane.b32.xlu0 %v694, 1
        %v765 = vpop.permute.xlu0 %764
        %766 = vrot.lane.b32.xlu0 %v695, 1
        %v767 = vpop.permute.xlu0 %766
        %v770 = vsel %vm293, 1e+30, %v765
        %v771 = vsel %vm293, 1e+30, %v767
        %v772 = vmin.f32 %v762, %v770
        %v773 = vmin.f32 %v763, %v771
        %v774 = vmin.f32 %v752, %v772
        %v775 = vmin.f32 %v753, %v773
        %v778 = vrot.slane %v774, 1
        %v779 = vrot.slane %v775, 1
        %v780 = vsel %vm258, %v778, %v779
        %v783 = vsel %vm258, %v779, -1e+30
        %v784 = vmax.f32 %v780, %v774
        %v785 = vmax.f32 %v783, %v775
        %v786 = vrot.slane %v774, 7
        %v787 = vrot.slane %v775, 7
        %v788 = vsel %vm267, %v786, %v787
        %v791 = vsel %vm267, -1e+30, %v786
        %v792 = vmax.f32 %v784, %v791
        %v793 = vmax.f32 %v785, %v788
        %796 = vrot.lane.b32.xlu0 %v792, 127
        %v797 = vpop.permute.xlu0 %796
        %798 = vrot.lane.b32.xlu0 %v793, 127
        %v799 = vpop.permute.xlu0 %798
        %v802 = vsel %vm282, %v797, -1e+30
        %v803 = vsel %vm282, %v799, -1e+30
        %v804 = vmax.f32 %v802, %v792
        %v805 = vmax.f32 %v803, %v793
        %806 = vrot.lane.b32.xlu0 %v792, 1
        %v807 = vpop.permute.xlu0 %806
        %808 = vrot.lane.b32.xlu0 %v793, 1
        %v809 = vpop.permute.xlu0 %808
        %v812 = vsel %vm293, -1e+30, %v807
        %v813 = vsel %vm293, -1e+30, %v809
        %v814 = vmax.f32 %v804, %v812
        %v815 = vmax.f32 %v805, %v813
        %v816 = vsub.f32 %v694, %v814
        %v817 = vsub.f32 %v695, %v815
        %v818 = vmax.f32 %v816, 0.0
        %v819 = vmax.f32 %v817, 0.0
        %v820 = vmul.f32 %v746, %v818
        %v821 = vmul.f32 %v747, %v819
        %v822 = vsub.f32 %v818, %v820
        %v823 = vsub.f32 %v819, %v821
        %v824 = vmax.f32 %v822, 0.0
        %v825 = vmax.f32 %v823, 0.0
        %v826 = vadd.f32 %v746, %v824
        %v827 = vadd.f32 %v747, %v825
        %v828 = vsel %vm258, %v779, 1e+30
        %v829 = vmin.f32 %v780, %v774
        %v830 = vmin.f32 %v828, %v775
        %v831 = vsel %vm267, 1e+30, %v786
        %v832 = vmin.f32 %v829, %v831
        %v833 = vmin.f32 %v830, %v788
        %834 = vrot.lane.b32.xlu0 %v774, 127
        %v835 = vpop.permute.xlu0 %834
        %836 = vrot.lane.b32.xlu0 %v775, 127
        %v837 = vpop.permute.xlu0 %836
        %v840 = vsel %vm282, %v835, 1e+30
        %v841 = vsel %vm282, %v837, 1e+30
        %v842 = vmin.f32 %v840, %v774
        %v843 = vmin.f32 %v841, %v775
        %844 = vrot.lane.b32.xlu0 %v774, 1
        %v845 = vpop.permute.xlu0 %844
        %846 = vrot.lane.b32.xlu0 %v775, 1
        %v847 = vpop.permute.xlu0 %846
        %v850 = vsel %vm293, 1e+30, %v845
        %v851 = vsel %vm293, 1e+30, %v847
        %v852 = vmin.f32 %v842, %v850
        %v853 = vmin.f32 %v843, %v851
        %v854 = vmin.f32 %v832, %v852
        %v855 = vmin.f32 %v833, %v853
        %v858 = vrot.slane %v854, 1
        %v859 = vrot.slane %v855, 1
        %v860 = vsel %vm258, %v858, %v859
        %v863 = vsel %vm258, %v859, -1e+30
        %v864 = vmax.f32 %v860, %v854
        %v865 = vmax.f32 %v863, %v855
        %v866 = vrot.slane %v854, 7
        %v867 = vrot.slane %v855, 7
        %v868 = vsel %vm267, %v866, %v867
        %v871 = vsel %vm267, -1e+30, %v866
        %v872 = vmax.f32 %v864, %v871
        %v873 = vmax.f32 %v865, %v868
        %876 = vrot.lane.b32.xlu0 %v872, 127
        %v877 = vpop.permute.xlu0 %876
        %878 = vrot.lane.b32.xlu0 %v873, 127
        %v879 = vpop.permute.xlu0 %878
        %v882 = vsel %vm282, %v877, -1e+30
        %v883 = vsel %vm282, %v879, -1e+30
        %v884 = vmax.f32 %v882, %v872
        %v885 = vmax.f32 %v883, %v873
        %886 = vrot.lane.b32.xlu0 %v872, 1
        %v887 = vpop.permute.xlu0 %886
        %888 = vrot.lane.b32.xlu0 %v873, 1
        %v889 = vpop.permute.xlu0 %888
        %v892 = vsel %vm293, -1e+30, %v887
        %v893 = vsel %vm293, -1e+30, %v889
        %v894 = vmax.f32 %v884, %v892
        %v895 = vmax.f32 %v885, %v893
        %v896 = vsub.f32 %v774, %v894
        %v897 = vsub.f32 %v775, %v895
        %v898 = vmax.f32 %v896, 0.0
        %v899 = vmax.f32 %v897, 0.0
        %v900 = vmul.f32 %v826, %v898
        %v901 = vmul.f32 %v827, %v899
        %v902 = vsub.f32 %v898, %v900
        %v903 = vsub.f32 %v899, %v901
        %v904 = vmax.f32 %v902, 0.0
        %v905 = vmax.f32 %v903, 0.0
        %v906 = vadd.f32 %v826, %v904
        %v907 = vadd.f32 %v827, %v905
        %v908 = vmul.f32 %v242, %v224
        %v909 = vmul.f32 %v243, %v225
        %vm910 = vcmask 130048
        %v911 = vsel %vm910, %v908, 0.0
        %912 = vadd.xlane.f32.xlu0 %v911
        %v913 = vpop.xlane.xlu0 %912
        %v914 = vsel %vm910, %v909, 0.0
        %915 = vadd.xlane.f32.xlu0 %v914
        %v916 = vpop.xlane.xlu0 %915
        %v917 = vadd.f32 %v913, %v916
        %v918 = vrot.slane %v917, 4
        %v919 = vadd.f32 %v917, %v918
        %v920 = vrot.slane %v919, 2
        %v921 = vadd.f32 %v919, %v920
        %v922 = vrot.slane %v921, 1
        %v923 = vadd.f32 %v921, %v922
        %v924 = vsel %vm910, %v242, 0.0
        %925 = vadd.xlane.f32.xlu0 %v924
        %v926 = vpop.xlane.xlu0 %925
        %v927 = vsel %vm910, %v243, 0.0
        %928 = vadd.xlane.f32.xlu0 %v927
        %v929 = vpop.xlane.xlu0 %928
        %v930 = vadd.f32 %v926, %v929
        %v931 = vrot.slane %v930, 4
        %v932 = vadd.f32 %v930, %v931
        %v933 = vrot.slane %v932, 2
        %v934 = vadd.f32 %v932, %v933
        %v935 = vrot.slane %v934, 1
        %v936 = vadd.f32 %v934, %v935
        %v937 = vsel %vm910, %v224, 0.0
        %938 = vadd.xlane.f32.xlu0 %v937
        %v939 = vpop.xlane.xlu0 %938
        %v940 = vsel %vm910, %v225, 0.0
        %941 = vadd.xlane.f32.xlu0 %v940
        %v942 = vpop.xlane.xlu0 %941
        %v943 = vadd.f32 %v939, %v942
        %v944 = vrot.slane %v943, 4
        %v945 = vadd.f32 %v943, %v944
        %v946 = vrot.slane %v945, 2
        %v947 = vadd.f32 %v945, %v946
        %v948 = vrot.slane %v947, 1
        %v949 = vadd.f32 %v947, %v948
        %v950 = vsel %vm910, %v254, 0.0
        %951 = vadd.xlane.f32.xlu0 %v950
        %v952 = vpop.xlane.xlu0 %951
        %v953 = vsel %vm910, %v255, 0.0
        %954 = vadd.xlane.f32.xlu0 %v953
        %v955 = vpop.xlane.xlu0 %954
        %v956 = vadd.f32 %v952, %v955
        %v957 = vrot.slane %v956, 4
        %v958 = vadd.f32 %v956, %v957
        %v959 = vrot.slane %v958, 2
        %v960 = vadd.f32 %v958, %v959
        %v961 = vrot.slane %v960, 1
        %v962 = vadd.f32 %v960, %v961
        %v963 = vmul.f32 %v582, %v224
        %v964 = vmul.f32 %v583, %v225
        %v965 = vsel %vm910, %v963, 0.0
        %966 = vadd.xlane.f32.xlu0 %v965
        %v967 = vpop.xlane.xlu0 %966
        %v968 = vsel %vm910, %v964, 0.0
        %969 = vadd.xlane.f32.xlu0 %v968
        %v970 = vpop.xlane.xlu0 %969
        %v971 = vadd.f32 %v967, %v970
        %v972 = vrot.slane %v971, 4
        %v973 = vadd.f32 %v971, %v972
        %v974 = vrot.slane %v973, 2
        %v975 = vadd.f32 %v973, %v974
        %v976 = vrot.slane %v975, 1
        %v977 = vadd.f32 %v975, %v976
        %v978 = vsel %vm910, %v582, 0.0
        %979 = vadd.xlane.f32.xlu0 %v978
        %v980 = vpop.xlane.xlu0 %979
        %v981 = vsel %vm910, %v583, 0.0
        %982 = vadd.xlane.f32.xlu0 %v981
        %v983 = vpop.xlane.xlu0 %982
        %v984 = vadd.f32 %v980, %v983
        %v985 = vrot.slane %v984, 4
        %v986 = vadd.f32 %v984, %v985
        %v987 = vrot.slane %v986, 2
        %v988 = vadd.f32 %v986, %v987
        %v989 = vrot.slane %v988, 1
        %v990 = vadd.f32 %v988, %v989
        %v991 = vmul.f32 %v906, %v242
        %v992 = vmul.f32 %v907, %v243
        %v993 = vsel %vm910, %v991, 0.0
        %994 = vadd.xlane.f32.xlu0 %v993
        %v995 = vpop.xlane.xlu0 %994
        %v996 = vsel %vm910, %v992, 0.0
        %997 = vadd.xlane.f32.xlu0 %v996
        %v998 = vpop.xlane.xlu0 %997
        %v999 = vadd.f32 %v995, %v998
        %v1000 = vrot.slane %v999, 4
        %v1001 = vadd.f32 %v999, %v1000
        %v1002 = vrot.slane %v1001, 2
        %v1003 = vadd.f32 %v1001, %v1002
        %v1004 = vrot.slane %v1003, 1
        %v1005 = vadd.f32 %v1003, %v1004
        %v1006 = vsel %vm910, %v906, 0.0
        %1007 = vadd.xlane.f32.xlu0 %v1006
        %v1008 = vpop.xlane.xlu0 %1007
        %v1009 = vsel %vm910, %v907, 0.0
        %1010 = vadd.xlane.f32.xlu0 %v1009
        %v1011 = vpop.xlane.xlu0 %1010
        %v1012 = vadd.f32 %v1008, %v1011
        %v1013 = vrot.slane %v1012, 4
        %v1014 = vadd.f32 %v1012, %v1013
        %v1015 = vrot.slane %v1014, 2
        %v1016 = vadd.f32 %v1014, %v1015
        %v1017 = vrot.slane %v1016, 1
        %v1018 = vadd.f32 %v1016, %v1017
        %v1019 = vsel %vm293, %v923, %v936
        %vm1020 = vcmask 15360
        %v1021 = vsel %vm1020, %v1019, %v949
        %vm1022 = vcmask 23552
        %v1023 = vsel %vm1022, %v1021, %v962
        %vm1024 = vcmask 31744
        %v1025 = vsel %vm1024, %v1023, %v977
        %vm1026 = vcmask 39936
        %v1027 = vsel %vm1026, %v1025, %v990
        %vm1028 = vcmask 48128
        %v1029 = vsel %vm1028, %v1027, %v1005
        %vm1030 = vcmask 56320
        %v1031 = vsel %vm1030, %v1029, %v1018
        %s1032 = scalar_lea.vmem %s221, %s24
        %vm1033 = vcmask 57344
        %1034 = vst.msk [vmem:[%s1032] sm:$0x1] %vm1033, %v1031
        %p1035 = scmp.lt.s32.totalorder %s23, 1
        %s1036 = scalar_select %p1035, %s23, 1
        %s1037 = smul.addr %s1036, 4
        %s1038 = scalar_lea.vmem %s2, %s1037
        // Predicated region
        $region37: #{cl_and_dc_and_bce_loss.1} parent=27 // pred_check
          %p1039 = pneg %p105
        $region38: #{cl_and_dc_and_bce_loss.1} parent=27 // pred_check_branch
          %1041 = sbr.rel (%p1039) target = $region40
        $region39: #{cl_and_dc_and_bce_loss.1} parent=27 // pred_region
          _
        $region40: #{cl_and_dc_and_bce_loss.1} parent=27 // pred_fallthru
          _
      $region28: #{cl_and_dc_and_bce_loss.1} parent=5 // pred_fallthru
        _
      %p1042 = scmp.le.s32.totalorder 2, %s14
      // Predicated region
      $region41: #{cl_and_dc_and_bce_loss.1} parent=5 // pred_check
        %p1043 = pneg %p1042
      $region42: #{cl_and_dc_and_bce_loss.1} parent=5 // pred_check_branch
        %1045 = sbr.rel (%p1043) target = $region44
      $region43: #{cl_and_dc_and_bce_loss.1} parent=5 // pred_region
        %s1046 = ssub.s32 %s14, 2
        // Predicated region
        $region45: #{cl_and_dc_and_bce_loss.1} parent=43 // pred_check
          %p1047 = pneg %p111
        $region46: #{cl_and_dc_and_bce_loss.1} parent=43 // pred_check_branch
          %1049 = sbr.rel (%p1047) target = $region48
        $region47: #{cl_and_dc_and_bce_loss.1} parent=43 // pred_region
          %p1050 = scmp.lt.s32.totalorder %s25, 1
          %s1051 = scalar_select %p1050, %s25, 1
          %s1052 = smul.addr %s1051, 4
          %s1053 = scalar_lea.vmem %s2, %s1052
        $region48: #{cl_and_dc_and_bce_loss.1} parent=43 // pred_fallthru
          _
      $region44: #{cl_and_dc_and_bce_loss.1} parent=5 // pred_fallthru
        _
    $region6: #{cl_and_dc_and_bce_loss.1} parent=1 // loop_footer
      %s18 = sadd.s32 1, %s14
    $region7: #{cl_and_dc_and_bce_loss.1} parent=1 // loop_footer_branch
      %13 = sbr.rel target = $region3
    $region8: #{cl_and_dc_and_bce_loss.1} parent=1 // loop_exit
      _
    %1054 = vsyncpa [#allocation3], 1
    %s1055 = scalar_lea.sflag [#allocation3], 1
    %1056 = vsyncpa %s1055, 1
    %1057 = vsyncpa [#allocation5], 1
    %s1058 = scalar_lea.sflag [#allocation5], 1
    %1059 = vsyncpa %s1058, 1

</llo_original>
